<compile_context>
chip_gen: v7x
topology: tpu7x:2x2x1
jax: 0.10.0
libtpu: 0.0.40
codegen_flags: <defaults>
</compile_context>

<pallas_src>
import functools
import math

import jax
import jax.numpy as jnp
from jax.experimental import pallas as pl
from jax.experimental.pallas import tpu as pltpu


def _gptq_lora_kernel(x_ref, qp_ref, s_ref, z_ref, bias_ref, ax_ref, bt_ref,
                      o_ref, acc_ref, *, gk, deq_dtype):
    # x_ref:    (tm, tk)      bf16 activation chunk
    # qp_ref:   (tk//2, tn)   int8 packed int4 codes (chunk-local: byte i packs
    #                         chunk row i (low nibble) and row i + tk//2 (high))
    # s_ref:    (2*gk, tn)    f32 per-group scales for this chunk
    # z_ref:    (2*gk, tn)    f32 per-group zero points for this chunk
    # bias_ref: (1, tn)       f32 base-layer bias tile
    # ax_ref:   (tm, r)       bf16 scaling * (x @ lora_A^T)  (j/k-invariant)
    # bt_ref:   (r, tn)       bf16 lora_B^T tile
    # o_ref:    (tm, tn)      output tile
    # acc_ref:  (tm, tn)      f32 accumulator, persistent across the k axis
    k = pl.program_id(2)

    @pl.when(k == 0)
    def _():
        # Seed the accumulator with the LoRA update + bias, so the epilogue is
        # a pure cast (no extra (tm, tn) add / temporary).
        acc_ref[...] = (
            jnp.dot(ax_ref[...], bt_ref[...], preferred_element_type=jnp.float32)
            + bias_ref[...])

    tkp, tn = qp_ref.shape          # tkp = tk // 2
    gs = tkp // gk                  # quantization group size

    # ---- int4 unpack: per-nibble masks make the int8 sign extension benign --
    qp = qp_ref[...].astype(jnp.int32)
    lo = (qp & 0xF).astype(deq_dtype)            # chunk rows [0, tkp)
    hi = ((qp >> 4) & 0xF).astype(deq_dtype)     # chunk rows [tkp, 2*tkp)

    # ---- per-group dequant (bf16 math on v6e/v7x, f32 on v5e) ----------------
    s = s_ref[...].astype(deq_dtype)
    z = z_ref[...].astype(deq_dtype)
    w_lo = ((lo.reshape(gk, gs, tn) - z[:gk, None, :]) * s[:gk, None, :]
            ).reshape(tkp, tn).astype(jnp.bfloat16)
    w_hi = ((hi.reshape(gk, gs, tn) - z[gk:, None, :]) * s[gk:, None, :]
            ).reshape(tkp, tn).astype(jnp.bfloat16)

    # ---- two partial MXU dots into the shared f32 accumulator (no concat) ----
    x = x_ref[...]
    acc_ref[...] += jnp.dot(x[:, :tkp], w_lo, preferred_element_type=jnp.float32)
    acc_ref[...] += jnp.dot(x[:, tkp:], w_hi, preferred_element_type=jnp.float32)

    @pl.when(k == pl.num_programs(2) - 1)
    def _():
        o_ref[...] = acc_ref[...].astype(o_ref.dtype)


def pack_int4(codes, tk):
    """(K, N) int codes in [0, 16) -> (K//2, N) int8, chunk-local lo|hi packing.

    Within each K-chunk of size tk, packed byte row i holds chunk row i in the
    low nibble and chunk row i + tk//2 in the high nibble, so the in-kernel
    unpack is two masks and the halves feed two partial dots (no concat).
    NOTE: this is the kernel's own layout, not the GPTQ checkpoint qzeros/qweight
    packing; real checkpoints need a one-time repack."""
    K, N = codes.shape
    assert K % tk == 0 and tk % 2 == 0
    tkp = tk // 2
    c = codes.reshape(K // tk, 2, tkp, N).astype(jnp.int32)
    packed = c[:, 0] | (c[:, 1] << 4)                       # values in [0, 256)
    packed = jnp.where(packed > 127, packed - 256, packed)  # two's complement
    return packed.astype(jnp.int8).reshape(K // 2, N)


def _choose_tk(K, group_size, target=1024):
    """Largest K-chunk <= target keeping lane (128) and group alignment for the
    lo/hi-half split and an (8,·)-friendly scales block; falls back to tk=K."""
    step = math.lcm(256, 8 * group_size)
    if K <= step or K % step != 0:
        return K
    tk = max(step, (min(target, K) // step) * step)
    while tk > step and K % tk != 0:
        tk -= step
    if tk <= 0 or K % tk != 0:
        return K
    return tk


def _deq_dtype_for_device():
    """bf16 dequant math on chips with a bf16 VALU (v6e/v7x); f32 otherwise."""
    try:
        kind = jax.devices()[0].device_kind.lower()
    except Exception:
        kind = ""
    return jnp.bfloat16 if ("v6" in kind or "v7" in kind) else jnp.float32


def gptq_lora_linear(x_bf16, qpacked, scales, zeros_f32, bias, ax_bf16, lora_b_t,
                     *, group_size, tk, deq_dtype=jnp.bfloat16,
                     out_dtype=jnp.float32):
    """x_bf16: (M, K) bf16; qpacked: (K//2, N) int8 (chunk-local packing for tk);
    scales/zeros_f32: (Kg, N) f32; bias: (1, N) f32; ax_bf16: (M, r) bf16
    (= scaling * x @ A^T); lora_b_t: (r, N) bf16.  Returns (M, N) out_dtype."""
    M, K = x_bf16.shape
    N = qpacked.shape[1]
    Kg = scales.shape[0]
    r = lora_b_t.shape[0]

    assert qpacked.shape[0] * 2 == K
    assert K % tk == 0 and tk % (2 * group_size) == 0   # halves stay group-aligned
    assert Kg * group_size == K
    assert N % 128 == 0
    tn = 256 if N % 256 == 0 else 128

    tm = M if M <= 256 else 256
    assert M % tm == 0

    gk = tk // (2 * group_size)               # groups per half-chunk
    n_i, n_j, n_k = M // tm, N // tn, K // tk

    # VMEM budget: double-buffered tiles + dequant temporaries with headroom,
    # capped at 48 MiB so the same config survives v7x's 64 MiB physical VMEM.
    dts = jnp.dtype(deq_dtype).itemsize
    osz = jnp.dtype(out_dtype).itemsize
    tile_bytes = 2 * (tm * tk * 2 + (tk // 2) * tn + 2 * (2 * gk) * tn * 4
                      + tn * 4 + tm * r * 2 + r * tn * 2 + tm * tn * osz)
    tile_bytes += tm * tn * 4                                  # f32 accumulator
    temp_bytes = (tk // 2) * tn * (4 + 2 * dts + 2 * 2)        # qp i32, lo/hi, w_lo/hi
    vmem_limit = int(min(48 * 2**20, max(24 * 2**20, 2 * (tile_bytes + temp_bytes))))

    flops = 2 * M * N * K + 2 * M * N * r
    bytes_accessed = (
        n_j * M * K * 2              # activations, re-streamed per N tile
        + n_i * (K // 2) * N         # packed int4 weights, re-streamed per M tile
        + n_i * 2 * Kg * N * 4       # scales + zeros
        + n_i * (N * 4 + r * N * 2)  # bias + lora_B^T
        + M * r * 2                  # scaled LoRA-A projection
        + M * N * osz)               # output

    kernel = functools.partial(_gptq_lora_kernel, gk=gk, deq_dtype=deq_dtype)

    return pl.pallas_call(
        kernel,
        out_shape=jax.ShapeDtypeStruct((M, N), out_dtype),
        grid_spec=pltpu.PrefetchScalarGridSpec(
            num_scalar_prefetch=0,
            grid=(n_i, n_j, n_k),
            in_specs=[
                pl.BlockSpec((tm, tk), lambda i, j, k: (i, k)),       # x chunk
                pl.BlockSpec((tk // 2, tn), lambda i, j, k: (k, j)),  # packed int4
                pl.BlockSpec((2 * gk, tn), lambda i, j, k: (k, j)),   # group scales
                pl.BlockSpec((2 * gk, tn), lambda i, j, k: (k, j)),   # group zeros
                pl.BlockSpec((1, tn), lambda i, j, k: (0, j)),        # bias tile
                pl.BlockSpec((tm, r), lambda i, j, k: (i, 0)),        # scaled A-proj
                pl.BlockSpec((r, tn), lambda i, j, k: (0, j)),        # lora_B^T tile
            ],
            out_specs=pl.BlockSpec((tm, tn), lambda i, j, k: (i, j)),
            scratch_shapes=[pltpu.VMEM((tm, tn), jnp.float32)],
        ),
        compiler_params=pltpu.CompilerParams(
            dimension_semantics=("parallel", "parallel", "arbitrary"),
            vmem_limit_bytes=vmem_limit),
        cost_estimate=pl.CostEstimate(
            flops=flops, transcendentals=0, bytes_accessed=bytes_accessed),
    )(x_bf16, qpacked, scales, zeros_f32, bias, ax_bf16, lora_b_t)


def _round_up(a, b):
    return ((a + b - 1) // b) * b


def gptq_lora_forward(x, qweight, scales, zeros, bias, lora_A_w, lora_B_w,
                      scaling, *, out_dtype=jnp.float32):
    """Full GPTQLoraLinear forward. x: (..., K) f32; qweight: (K, N) int codes in
    [0,16); scales/zeros: (Kg, N); bias: (1, N); lora_A_w: (r, K);
    lora_B_w: (N, r).  Returns (..., N) out_dtype."""
    *lead, K = x.shape
    N = qweight.shape[1]
    Kg = scales.shape[0]
    group_size = K // Kg
    assert Kg * group_size == K
    assert K % (2 * group_size) == 0     # lo/hi halves must stay group-aligned
    assert K % 256 == 0                  # lane-aligned half split inside a chunk

    x2d = x.reshape(-1, K)
    M = x2d.shape[0]
    # Pad M: sublane-friendly for decode, multiple of tm=256 for prefill.
    Mp = _round_up(M, 16) if M <= 256 else _round_up(M, 256)
    if Mp != M:
        x2d = jnp.pad(x2d, ((0, Mp - M), (0, 0)))

    # Hoist the j/k-invariant LoRA-A projection out of the kernel grid and fold
    # `scaling` into it (lora_dropout p=0.0 is identity at inference).
    ax = (x2d @ lora_A_w.T) * scaling                      # (Mp, r) f32

    tk = _choose_tk(K, group_size)
    qpacked = pack_int4(qweight, tk)                       # (K//2, N) int8
    deq_dtype = _deq_dtype_for_device()

    # TODO(synk): disable_adapters branch, multi-adapter loop, lora_dropout p>0,
    # and DoRA/QA-LoRA variants are not part of the fused inference kernel.
    out = gptq_lora_linear(
        x2d.astype(jnp.bfloat16), qpacked,
        scales.astype(jnp.float32), zeros.astype(jnp.float32),
        bias.astype(jnp.float32), ax.astype(jnp.bfloat16),
        lora_B_w.T.astype(jnp.bfloat16),
        group_size=group_size, tk=tk, deq_dtype=deq_dtype, out_dtype=out_dtype)
    return out[:M].reshape(*lead, N)


if __name__ == "__main__":
    # ---- Module hyperparameters (synthetic, deterministic) -------------------
    batch, seq = 2, 8
    in_features, out_features = 256, 512
    r, lora_alpha = 16, 32
    scaling = lora_alpha / r          # use_rslora=False
    group_size = 32                   # GPTQ quantization group size
    n_groups = in_features // group_size

    key = jax.random.PRNGKey(0)
    k_x, k_q, k_s, k_z, k_a, k_b, k_bias = jax.random.split(key, 7)

    x = jax.random.normal(k_x, (batch, seq, in_features), dtype=jnp.float32)

    # Synthetic GPTQ base layer: int4 codes + per-group scales / zero-points.
    qweight = jax.random.randint(k_q, (in_features, out_features), 0, 16, dtype=jnp.int32)
    scales = 0.01 + 0.05 * jax.random.uniform(k_s, (n_groups, out_features), dtype=jnp.float32)
    zeros = jax.random.randint(k_z, (n_groups, out_features), 0, 16, dtype=jnp.int32)
    bias = 0.1 * jax.random.normal(k_bias, (1, out_features), dtype=jnp.float32)

    # LoRA weights. PyTorch: lora_A.weight is (r, in), lora_B.weight is (out, r).
    # init_lora_weights=True would set B = 0; use small random B so the LoRA
    # path is actually exercised (forward semantics are unchanged).
    lora_A_w = jax.random.normal(k_a, (r, in_features), dtype=jnp.float32) * (1.0 / in_features) ** 0.5
    lora_B_w = jax.random.normal(k_b, (out_features, r), dtype=jnp.float32) * 0.01

    out = gptq_lora_forward(x, qweight, scales, zeros, bias, lora_A_w, lora_B_w,
                            scaling)
    jax.block_until_ready(out)

    # ---- Pure-JAX reference using the same rounding as the kernel ------------
    deq = _deq_dtype_for_device()
    x2d = x.reshape(-1, in_features)
    s_rep = jnp.repeat(scales, group_size, axis=0).astype(deq)
    z_rep = jnp.repeat(zeros, group_size, axis=0).astype(deq)
    w_bf = ((qweight.astype(deq) - z_rep) * s_rep).astype(jnp.bfloat16).astype(jnp.float32)
    x_bf = x2d.astype(jnp.bfloat16).astype(jnp.float32)
    ax_bf = ((x2d @ lora_A_w.T) * scaling).astype(jnp.bfloat16).astype(jnp.float32)
    b_bf = lora_B_w.T.astype(jnp.bfloat16).astype(jnp.float32)
    ref = (x_bf @ w_bf + bias + ax_bf @ b_bf).reshape(batch, seq, out_features)

    assert jnp.allclose(out, ref, atol=2e-2, rtol=2e-2), "mismatch vs reference"

    print("KERNEL_OK")
</pallas_src>

<mosaic_0001>
module attributes {stable_mosaic.version = 11 : i64} {
  func.func @_gptq_lora_kernel(%arg0: i32, %arg1: i32, %arg2: i32, %arg3: memref<16x256xbf16, #tpu.memory_space<vmem>>, %arg4: memref<128x256xi8, #tpu.memory_space<vmem>>, %arg5: memref<8x256xf32, #tpu.memory_space<vmem>>, %arg6: memref<8x256xf32, #tpu.memory_space<vmem>>, %arg7: memref<1x256xf32, #tpu.memory_space<vmem>>, %arg8: memref<16x16xbf16, #tpu.memory_space<vmem>>, %arg9: memref<16x256xbf16, #tpu.memory_space<vmem>>, %arg10: memref<16x256xf32, #tpu.memory_space<vmem>>, %arg11: memref<16x256xf32, #tpu.memory_space<vmem>>) attributes {dimension_semantics = [#tpu.dimension_semantics<parallel>, #tpu.dimension_semantics<parallel>, #tpu.dimension_semantics<arbitrary>], iteration_bounds = array<i64: 1, 2, 1>, scalar_prefetch = 0 : i64, scratch_operands = 1 : i64, tpu.core_type = #tpu.core_type<tc>, window_params = [{transform_indices = @transform_0, window_bounds = array<i64: 16, 256>}, {transform_indices = @transform_1, window_bounds = array<i64: 128, 256>}, {transform_indices = @transform_2, window_bounds = array<i64: 8, 256>}, {transform_indices = @transform_3, window_bounds = array<i64: 8, 256>}, {transform_indices = @transform_4, window_bounds = array<i64: 1, 256>}, {transform_indices = @transform_5, window_bounds = array<i64: 16, 16>}, {transform_indices = @transform_6, window_bounds = array<i64: 16, 256>}, {transform_indices = @transform_7, window_bounds = array<i64: 16, 256>}]} {
    %c0_i32 = arith.constant 0 : i32
    %0 = arith.cmpi eq, %arg2, %c0_i32 : i32
    %1 = arith.extui %0 : i1 to i32
    %c0_i32_0 = arith.constant 0 : i32
    %2 = arith.cmpi ne, %1, %c0_i32_0 : i32
    scf.if %2 {
      %c0_20 = arith.constant 0 : index
      %c0_21 = arith.constant 0 : index
      %51 = vector.load %arg8[%c0_20, %c0_21] : memref<16x16xbf16, #tpu.memory_space<vmem>>, vector<16x16xbf16>
      %c0_22 = arith.constant 0 : index
      %c0_23 = arith.constant 0 : index
      %52 = vector.load %arg9[%c0_22, %c0_23] : memref<16x256xbf16, #tpu.memory_space<vmem>>, vector<16x256xbf16>
      %cst_24 = arith.constant dense<0.000000e+00> : vector<16x256xf32>
      %53 = tpu.matmul %51, %52, %cst_24 {dimension_numbers = #tpu.dot_dimension_numbers<[1], [0], [0], [1], [0, 0, 1, 1], [], []>} : vector<16x16xbf16>, vector<16x256xbf16>, vector<16x256xf32> -> vector<16x256xf32>
      %c0_25 = arith.constant 0 : index
      %c0_26 = arith.constant 0 : index
      %54 = vector.load %arg7[%c0_25, %c0_26] : memref<1x256xf32, #tpu.memory_space<vmem>>, vector<1x256xf32>
      %55 = vector.broadcast %54 : vector<1x256xf32> to vector<16x256xf32>
      %56 = arith.addf %53, %55 : vector<16x256xf32>
      %c0_27 = arith.constant 0 : index
      %c0_28 = arith.constant 0 : index
      %57 = vector.load %arg11[%c0_27, %c0_28] : memref<16x256xf32, #tpu.memory_space<vmem>>, vector<16x256xf32>
      tpu.vector_store %arg11[%c0_27, %c0_28], %56 {strides = array<i32>} : memref<16x256xf32, #tpu.memory_space<vmem>>, vector<16x256xf32>,
    } else {
    }
    %c0 = arith.constant 0 : index
    %c0_1 = arith.constant 0 : index
    %3 = vector.load %arg4[%c0, %c0_1] : memref<128x256xi8, #tpu.memory_space<vmem>>, vector<128x256xi8>
    %4 = arith.extsi %3 : vector<128x256xi8> to vector<128x256xi32>
    %c15_i32 = arith.constant 15 : i32
    %5 = vector.broadcast %c15_i32 : i32 to vector<128x256xi32>
    %6 = arith.andi %4, %5 : vector<128x256xi32>
    %7 = arith.sitofp %6 : vector<128x256xi32> to vector<128x256xf32>
    %c4_i32 = arith.constant 4 : i32
    %8 = vector.broadcast %c4_i32 : i32 to vector<128x256xi32>
    %9 = arith.shrsi %4, %8 : vector<128x256xi32>
    %c15_i32_2 = arith.constant 15 : i32
    %10 = vector.broadcast %c15_i32_2 : i32 to vector<128x256xi32>
    %11 = arith.andi %9, %10 : vector<128x256xi32>
    %12 = arith.sitofp %11 : vector<128x256xi32> to vector<128x256xf32>
    %c0_3 = arith.constant 0 : index
    %c0_4 = arith.constant 0 : index
    %13 = vector.load %arg5[%c0_3, %c0_4] : memref<8x256xf32, #tpu.memory_space<vmem>>, vector<8x256xf32>
    %c0_5 = arith.constant 0 : index
    %c0_6 = arith.constant 0 : index
    %14 = vector.load %arg6[%c0_5, %c0_6] : memref<8x256xf32, #tpu.memory_space<vmem>>, vector<8x256xf32>
    %15 = vector.shape_cast %7 : vector<128x256xf32> to vector<4x32x256xf32>
    %16 = vector.extract_strided_slice %14 {offsets = [0, 0], sizes = [4, 256], strides = [1, 1]} : vector<8x256xf32> to vector<4x256xf32>
    %17 = vector.shape_cast %16 : vector<4x256xf32> to vector<4x1x256xf32>
    %18 = vector.broadcast %17 : vector<4x1x256xf32> to vector<4x32x256xf32>
    %19 = arith.subf %15, %18 : vector<4x32x256xf32>
    %20 = vector.extract_strided_slice %13 {offsets = [0, 0], sizes = [4, 256], strides = [1, 1]} : vector<8x256xf32> to vector<4x256xf32>
    %21 = vector.shape_cast %20 : vector<4x256xf32> to vector<4x1x256xf32>
    %22 = vector.broadcast %21 : vector<4x1x256xf32> to vector<4x32x256xf32>
    %23 = arith.mulf %19, %22 : vector<4x32x256xf32>
    %24 = vector.shape_cast %23 : vector<4x32x256xf32> to vector<128x256xf32>
    %25 = arith.truncf %24 : vector<128x256xf32> to vector<128x256xbf16>
    %26 = vector.shape_cast %12 : vector<128x256xf32> to vector<4x32x256xf32>
    %27 = vector.extract_strided_slice %14 {offsets = [4, 0], sizes = [4, 256], strides = [1, 1]} : vector<8x256xf32> to vector<4x256xf32>
    %28 = vector.shape_cast %27 : vector<4x256xf32> to vector<4x1x256xf32>
    %29 = vector.broadcast %28 : vector<4x1x256xf32> to vector<4x32x256xf32>
    %30 = arith.subf %26, %29 : vector<4x32x256xf32>
    %31 = vector.extract_strided_slice %13 {offsets = [4, 0], sizes = [4, 256], strides = [1, 1]} : vector<8x256xf32> to vector<4x256xf32>
    %32 = vector.shape_cast %31 : vector<4x256xf32> to vector<4x1x256xf32>
    %33 = vector.broadcast %32 : vector<4x1x256xf32> to vector<4x32x256xf32>
    %34 = arith.mulf %30, %33 : vector<4x32x256xf32>
    %35 = vector.shape_cast %34 : vector<4x32x256xf32> to vector<128x256xf32>
    %36 = arith.truncf %35 : vector<128x256xf32> to vector<128x256xbf16>
    %c0_7 = arith.constant 0 : index
    %c0_8 = arith.constant 0 : index
    %37 = vector.load %arg3[%c0_7, %c0_8] : memref<16x256xbf16, #tpu.memory_space<vmem>>, vector<16x256xbf16>
    %c0_9 = arith.constant 0 : index
    %c0_10 = arith.constant 0 : index
    %38 = vector.load %arg11[%c0_9, %c0_10] : memref<16x256xf32, #tpu.memory_space<vmem>>, vector<16x256xf32>
    %39 = vector.extract_strided_slice %37 {offsets = [0, 0], sizes = [16, 128], strides = [1, 1]} : vector<16x256xbf16> to vector<16x128xbf16>
    %cst = arith.constant dense<0.000000e+00> : vector<16x256xf32>
    %40 = tpu.matmul %39, %25, %cst {dimension_numbers = #tpu.dot_dimension_numbers<[1], [0], [0], [1], [0, 0, 1, 1], [], []>} : vector<16x128xbf16>, vector<128x256xbf16>, vector<16x256xf32> -> vector<16x256xf32>
    %41 = arith.addf %38, %40 : vector<16x256xf32>
    %c0_11 = arith.constant 0 : index
    %c0_12 = arith.constant 0 : index
    %42 = vector.load %arg11[%c0_11, %c0_12] : memref<16x256xf32, #tpu.memory_space<vmem>>, vector<16x256xf32>
    tpu.vector_store %arg11[%c0_11, %c0_12], %41 {strides = array<i32>} : memref<16x256xf32, #tpu.memory_space<vmem>>, vector<16x256xf32>,
    %c0_13 = arith.constant 0 : index
    %c0_14 = arith.constant 0 : index
    %43 = vector.load %arg11[%c0_13, %c0_14] : memref<16x256xf32, #tpu.memory_space<vmem>>, vector<16x256xf32>
    %44 = vector.extract_strided_slice %37 {offsets = [0, 128], sizes = [16, 128], strides = [1, 1]} : vector<16x256xbf16> to vector<16x128xbf16>
    %cst_15 = arith.constant dense<0.000000e+00> : vector<16x256xf32>
    %45 = tpu.matmul %44, %36, %cst_15 {dimension_numbers = #tpu.dot_dimension_numbers<[1], [0], [0], [1], [0, 0, 1, 1], [], []>} : vector<16x128xbf16>, vector<128x256xbf16>, vector<16x256xf32> -> vector<16x256xf32>
    %46 = arith.addf %43, %45 : vector<16x256xf32>
    %c0_16 = arith.constant 0 : index
    %c0_17 = arith.constant 0 : index
    %47 = vector.load %arg11[%c0_16, %c0_17] : memref<16x256xf32, #tpu.memory_space<vmem>>, vector<16x256xf32>
    tpu.vector_store %arg11[%c0_16, %c0_17], %46 {strides = array<i32>} : memref<16x256xf32, #tpu.memory_space<vmem>>, vector<16x256xf32>,
    %c0_i32_18 = arith.constant 0 : i32
    %48 = arith.cmpi eq, %arg2, %c0_i32_18 : i32
    %49 = arith.extui %48 : i1 to i32
    %c0_i32_19 = arith.constant 0 : i32
    %50 = arith.cmpi ne, %49, %c0_i32_19 : i32
    scf.if %50 {
      %c0_20 = arith.constant 0 : index
      %c0_21 = arith.constant 0 : index
      %51 = vector.load %arg11[%c0_20, %c0_21] : memref<16x256xf32, #tpu.memory_space<vmem>>, vector<16x256xf32>
      %c0_22 = arith.constant 0 : index
      %c0_23 = arith.constant 0 : index
      %52 = vector.load %arg10[%c0_22, %c0_23] : memref<16x256xf32, #tpu.memory_space<vmem>>, vector<16x256xf32>
      tpu.vector_store %arg10[%c0_22, %c0_23], %51 {strides = array<i32>} : memref<16x256xf32, #tpu.memory_space<vmem>>, vector<16x256xf32>,
    } else {
    }
    return
  }
  func.func @transform_0(%arg0: i32, %arg1: i32, %arg2: i32) -> (i32, i32) {
    %c0_i32 = arith.constant 0 : i32
    return %arg0, %arg2 : i32, i32
  }
  func.func @transform_1(%arg0: i32, %arg1: i32, %arg2: i32) -> (i32, i32) {
    %c0_i32 = arith.constant 0 : i32
    return %arg2, %arg1 : i32, i32
  }
  func.func @transform_2(%arg0: i32, %arg1: i32, %arg2: i32) -> (i32, i32) {
    %c0_i32 = arith.constant 0 : i32
    return %arg2, %arg1 : i32, i32
  }
  func.func @transform_3(%arg0: i32, %arg1: i32, %arg2: i32) -> (i32, i32) {
    %c0_i32 = arith.constant 0 : i32
    return %arg2, %arg1 : i32, i32
  }
  func.func @transform_4(%arg0: i32, %arg1: i32, %arg2: i32) -> (i32, i32) {
    %c0_i32 = arith.constant 0 : i32
    %c0_i32_0 = arith.constant 0 : i32
    return %c0_i32, %arg1 : i32, i32
  }
  func.func @transform_5(%arg0: i32, %arg1: i32, %arg2: i32) -> (i32, i32) {
    %c0_i32 = arith.constant 0 : i32
    %c0_i32_0 = arith.constant 0 : i32
    return %arg0, %c0_i32 : i32, i32
  }
  func.func @transform_6(%arg0: i32, %arg1: i32, %arg2: i32) -> (i32, i32) {
    %c0_i32 = arith.constant 0 : i32
    %c0_i32_0 = arith.constant 0 : i32
    return %c0_i32, %arg1 : i32, i32
  }
  func.func @transform_7(%arg0: i32, %arg1: i32, %arg2: i32) -> (i32, i32) {
    %c0_i32 = arith.constant 0 : i32
    return %arg0, %arg1 : i32, i32
  }
}

</mosaic_0001>

<llo_original>
// kernel: tpu_custom_call.1
$region0: #{tpu_custom_call.1}
  #allocation0 [shape = 'u32[]', space=smem, size = 0x4, offset = 0x4, fixed_abs, tag = 'smem constant byte address 0x4 - core index']
  #allocation1 [shape = 'u32[144,128]{1,0:T(1,128)}', space=vmem, size = 0x12000, scoped, tag = 'internal scratch']
  #allocation2 [shape = 'f32[16,256]{1,0:T(8,128)}', space=vmem, size = 0x4000, scoped, tag = 'scratch operand']
  %s0 = inlined_call_operand.hbm [shape: bf16[16,256], index: 0, kind: input, shape index: {}]
  %s1 = inlined_call_operand.hbm [shape: s8[128,512], index: 1, kind: input, shape index: {}]
  %s2 = inlined_call_operand.hbm [shape: f32[8,512], index: 2, kind: input, shape index: {}]
  %s3 = inlined_call_operand.hbm [shape: f32[8,512], index: 3, kind: input, shape index: {}]
  %s4 = inlined_call_operand.vmem [shape: f32[1,512], index: 4, kind: input, shape index: {}]
  %s5 = inlined_call_operand.vmem [shape: bf16[16,16], index: 5, kind: input, shape index: {}]
  %s6 = inlined_call_operand.hbm [shape: bf16[16,512], index: 6, kind: input, shape index: {}]
  %s7 = inlined_call_operand.hbm [shape: f32[16,512], index: 7, kind: output, shape index: {}]
  %s8 = sld [smem:[#allocation0]]
  $region89: #{tpu_custom_call.1} parent=0
    _
  %s10 = ssub.s32 1, %s8
  %s11 = scalar_select 0, %s10, %s8
  $region1: #{tpu_custom_call.1} parent=0
    #allocation3 [shape = 'u8[8192]{0}', space=vmem, size = 0x2000, scoped, tag = 'input window, operand 0, single buffered']
    #allocation4 [shape = 's32[2]{0}', space=sflag, size = 0x8, scoped, tag = 'scoped memory for tpu_custom_call.1']
    #allocation5 [shape = 's32[2]{0}', space=sflag, size = 0x8, scoped, tag = 'scoped memory for tpu_custom_call.1']
    #allocation6 [shape = 'u8[65536]{0}', space=vmem, size = 0x10000, scoped, tag = 'input window, operand 1']
    #allocation7 [shape = 's32[2]{0}', space=sflag, size = 0x8, scoped, tag = 'scoped memory for tpu_custom_call.1']
    #allocation8 [shape = 'u8[16384]{0}', space=vmem, size = 0x4000, scoped, tag = 'input window, operand 2']
    #allocation9 [shape = 'u8[16384]{0}', space=vmem, size = 0x4000, scoped, tag = 'input window, operand 3']
    #allocation10 [shape = 's32[2]{0}', space=sflag, size = 0x8, scoped, tag = 'scoped memory for tpu_custom_call.1']
    #allocation11 [shape = 'u8[16384]{0}', space=vmem, size = 0x4000, scoped, tag = 'input window, operand 6']
    #allocation12 [shape = 'u8[32768]{0}', space=vmem, size = 0x8000, scoped, tag = 'output window, operand 0']
    %12 = vsyncpa [#allocation4], 0
    %13 = vsyncpa [#allocation7], 0
    %s14 = scalar_lea.sflag [#allocation7], 1
    %15 = vsyncpa %s14, 0
    %16 = vsyncpa [#allocation10], 0
    %s17 = scalar_lea.sflag [#allocation10], 1
    %18 = vsyncpa %s17, 0
    %19 = vsyncpa [#allocation5], 0
    %s20 = scalar_lea.sflag [#allocation5], 1
    %21 = vsyncpa %s20, 0
    loop: start=0, step=1, limit=4
    $region2: #{tpu_custom_call.1} parent=1 // loop_pre_header
      _
    $region3: #{tpu_custom_call.1} parent=1 // loop_header
      %s23 = sphi 0, %s27
      %p24 = scmp.ge.s32.totalorder %s23, 4
      %s30 = sphi 0, %s49
      %s31 = sphi 0, %s45
      %s32 = sphi 0, %s41
      %s33 = sphi 0, %s30
      %s34 = sphi 0, %s31
      %s35 = sphi 0, %s32
      %s36 = sphi 0, %s33
      %s37 = sphi 0, %s34
      %s38 = sphi 0, %s35
      %s54 = sphi 0, %s56
      %s57 = sphi 0, %s54
      %s58 = sphi 0, %s57
      %s74 = sphi 0, %s58
      %s82 = sphi 0, %s84
      %s85 = sphi 0, %s82
      %s86 = sphi 0, %s85
      %s102 = sphi 0, %s86
      %s110 = sphi 0, %s112
      %s113 = sphi 0, %s110
      %s114 = sphi 0, %s113
      %s130 = sphi 0, %s114
      %s138 = sphi 0, %s140
      %s141 = sphi 0, %s138
      %s142 = sphi 0, %s141
      %s158 = sphi 0, %s142
      %s164 = sphi 0, %s166
      %s167 = sphi 0, %s164
      %s168 = sphi 0, %s167
      %s184 = sphi 0, %s168
      %s190 = sphi 0, %s192
      %s193 = sphi 0, %s190
      %s194 = sphi 0, %s193
      %s210 = sphi 0, %s194
      %s216 = sphi 0, %s218
      %s219 = sphi 0, %s216
      %s220 = sphi 0, %s219
      %s236 = sphi 0, %s220
      %s244 = sphi 0, %s246
      %s247 = sphi 0, %s244
      %s248 = sphi 0, %s247
      %s264 = sphi 0, %s248
    $region4: #{tpu_custom_call.1} parent=1 // loop_header_branch
      %26 = sbr.rel (%p24) target = $region8
    $region5: #{tpu_custom_call.1} parent=1 // loop_body
      %s28 = ssub.s32 %s23, 1
      %s29 = ssub.s32 %s23, 2
      %s39 = sadd.s32 1, %s32
      %p40 = scmp.ge.s32.totalorder %s39, 1
      %s41 = scalar_select %p40, 0, %s39
      %s42 = sadd.s32 1, %s31
      %s43 = scalar_select %p40, %s42, %s31
      %p44 = scmp.ge.s32.totalorder %s43, 2
      %s45 = scalar_select %p44, 0, %s43
      %s46 = sadd.s32 1, %s30
      %s47 = scalar_select %p44, %s46, %s30
      %p48 = scmp.ge.s32.totalorder %s47, 1
      %s49 = scalar_select %p48, 0, %s47
      %s50 = ssub.s32 %s30, %s49
      %s51 = ssub.s32 %s32, %s41
      %s52 = sor.u32 %s50, %s51
      %p53 = scmp.eq.s32.totalorder %s52, 0
      %s55 = sadd.s32 %s54, 1
      %s56 = scalar_select %p53, %s54, %s55
      %p59 = pneg %p53
      %p60 = scmp.eq.s32.totalorder %s23, 1
      %p61 = por %p59, %p60
      %p62 = scmp.ne.s32.totalorder %s54, %s57
      %p63 = scmp.eq.s32.totalorder %s23, 0
      %p64 = por %p62, %p63
      %p65 = scmp.ne.s32.totalorder %s54, %s57
      %p66 = scmp.eq.s32.totalorder %s28, 1
      %p67 = por %p65, %p66
      %p68 = scmp.ne.s32.totalorder %s57, %s58
      %p69 = scmp.eq.s32.totalorder %s28, 0
      %p70 = por %p68, %p69
      %p71 = scmp.ne.s32.totalorder %s57, %s58
      %p72 = scmp.eq.s32.totalorder %s29, 1
      %p73 = por %p71, %p72
      %p75 = scmp.ne.s32.totalorder %s58, %s74
      %p76 = scmp.eq.s32.totalorder %s29, 0
      %p77 = por %p75, %p76
      %s78 = ssub.s32 %s32, %s41
      %s79 = ssub.s32 %s31, %s45
      %s80 = sor.u32 %s78, %s79
      %p81 = scmp.eq.s32.totalorder %s80, 0
      %s83 = sadd.s32 %s82, 1
      %s84 = scalar_select %p81, %s82, %s83
      %p87 = pneg %p81
      %p88 = scmp.eq.s32.totalorder %s23, 1
      %p89 = por %p87, %p88
      %p90 = scmp.ne.s32.totalorder %s82, %s85
      %p91 = scmp.eq.s32.totalorder %s23, 0
      %p92 = por %p90, %p91
      %p93 = scmp.ne.s32.totalorder %s82, %s85
      %p94 = scmp.eq.s32.totalorder %s28, 1
      %p95 = por %p93, %p94
      %p96 = scmp.ne.s32.totalorder %s85, %s86
      %p97 = scmp.eq.s32.totalorder %s28, 0
      %p98 = por %p96, %p97
      %p99 = scmp.ne.s32.totalorder %s85, %s86
      %p100 = scmp.eq.s32.totalorder %s29, 1
      %p101 = por %p99, %p100
      %p103 = scmp.ne.s32.totalorder %s86, %s102
      %p104 = scmp.eq.s32.totalorder %s29, 0
      %p105 = por %p103, %p104
      %s106 = ssub.s32 %s32, %s41
      %s107 = ssub.s32 %s31, %s45
      %s108 = sor.u32 %s106, %s107
      %p109 = scmp.eq.s32.totalorder %s108, 0
      %s111 = sadd.s32 %s110, 1
      %s112 = scalar_select %p109, %s110, %s111
      %p115 = pneg %p109
      %p116 = scmp.eq.s32.totalorder %s23, 1
      %p117 = por %p115, %p116
      %p118 = scmp.ne.s32.totalorder %s110, %s113
      %p119 = scmp.eq.s32.totalorder %s23, 0
      %p120 = por %p118, %p119
      %p121 = scmp.ne.s32.totalorder %s110, %s113
      %p122 = scmp.eq.s32.totalorder %s28, 1
      %p123 = por %p121, %p122
      %p124 = scmp.ne.s32.totalorder %s113, %s114
      %p125 = scmp.eq.s32.totalorder %s28, 0
      %p126 = por %p124, %p125
      %p127 = scmp.ne.s32.totalorder %s113, %s114
      %p128 = scmp.eq.s32.totalorder %s29, 1
      %p129 = por %p127, %p128
      %p131 = scmp.ne.s32.totalorder %s114, %s130
      %p132 = scmp.eq.s32.totalorder %s29, 0
      %p133 = por %p131, %p132
      %s134 = ssub.s32 %s32, %s41
      %s135 = ssub.s32 %s31, %s45
      %s136 = sor.u32 %s134, %s135
      %p137 = scmp.eq.s32.totalorder %s136, 0
      %s139 = sadd.s32 %s138, 1
      %s140 = scalar_select %p137, %s138, %s139
      %p143 = pneg %p137
      %p144 = scmp.eq.s32.totalorder %s23, 1
      %p145 = por %p143, %p144
      %p146 = scmp.ne.s32.totalorder %s138, %s141
      %p147 = scmp.eq.s32.totalorder %s23, 0
      %p148 = por %p146, %p147
      %p149 = scmp.ne.s32.totalorder %s138, %s141
      %p150 = scmp.eq.s32.totalorder %s28, 1
      %p151 = por %p149, %p150
      %p152 = scmp.ne.s32.totalorder %s141, %s142
      %p153 = scmp.eq.s32.totalorder %s28, 0
      %p154 = por %p152, %p153
      %p155 = scmp.ne.s32.totalorder %s141, %s142
      %p156 = scmp.eq.s32.totalorder %s29, 1
      %p157 = por %p155, %p156
      %p159 = scmp.ne.s32.totalorder %s142, %s158
      %p160 = scmp.eq.s32.totalorder %s29, 0
      %p161 = por %p159, %p160
      %s162 = ssub.s32 %s31, %s45
      %p163 = scmp.eq.s32.totalorder %s162, 0
      %s165 = sadd.s32 %s164, 1
      %s166 = scalar_select %p163, %s164, %s165
      %p169 = pneg %p163
      %p170 = scmp.eq.s32.totalorder %s23, 1
      %p171 = por %p169, %p170
      %p172 = scmp.ne.s32.totalorder %s164, %s167
      %p173 = scmp.eq.s32.totalorder %s23, 0
      %p174 = por %p172, %p173
      %p175 = scmp.ne.s32.totalorder %s164, %s167
      %p176 = scmp.eq.s32.totalorder %s28, 1
      %p177 = por %p175, %p176
      %p178 = scmp.ne.s32.totalorder %s167, %s168
      %p179 = scmp.eq.s32.totalorder %s28, 0
      %p180 = por %p178, %p179
      %p181 = scmp.ne.s32.totalorder %s167, %s168
      %p182 = scmp.eq.s32.totalorder %s29, 1
      %p183 = por %p181, %p182
      %p185 = scmp.ne.s32.totalorder %s168, %s184
      %p186 = scmp.eq.s32.totalorder %s29, 0
      %p187 = por %p185, %p186
      %s188 = ssub.s32 %s30, %s49
      %p189 = scmp.eq.s32.totalorder %s188, 0
      %s191 = sadd.s32 %s190, 1
      %s192 = scalar_select %p189, %s190, %s191
      %p195 = pneg %p189
      %p196 = scmp.eq.s32.totalorder %s23, 1
      %p197 = por %p195, %p196
      %p198 = scmp.ne.s32.totalorder %s190, %s193
      %p199 = scmp.eq.s32.totalorder %s23, 0
      %p200 = por %p198, %p199
      %p201 = scmp.ne.s32.totalorder %s190, %s193
      %p202 = scmp.eq.s32.totalorder %s28, 1
      %p203 = por %p201, %p202
      %p204 = scmp.ne.s32.totalorder %s193, %s194
      %p205 = scmp.eq.s32.totalorder %s28, 0
      %p206 = por %p204, %p205
      %p207 = scmp.ne.s32.totalorder %s193, %s194
      %p208 = scmp.eq.s32.totalorder %s29, 1
      %p209 = por %p207, %p208
      %p211 = scmp.ne.s32.totalorder %s194, %s210
      %p212 = scmp.eq.s32.totalorder %s29, 0
      %p213 = por %p211, %p212
      %s214 = ssub.s32 %s31, %s45
      %p215 = scmp.eq.s32.totalorder %s214, 0
      %s217 = sadd.s32 %s216, 1
      %s218 = scalar_select %p215, %s216, %s217
      %p221 = pneg %p215
      %p222 = scmp.eq.s32.totalorder %s23, 1
      %p223 = por %p221, %p222
      %p224 = scmp.ne.s32.totalorder %s216, %s219
      %p225 = scmp.eq.s32.totalorder %s23, 0
      %p226 = por %p224, %p225
      %p227 = scmp.ne.s32.totalorder %s216, %s219
      %p228 = scmp.eq.s32.totalorder %s28, 1
      %p229 = por %p227, %p228
      %p230 = scmp.ne.s32.totalorder %s219, %s220
      %p231 = scmp.eq.s32.totalorder %s28, 0
      %p232 = por %p230, %p231
      %p233 = scmp.ne.s32.totalorder %s219, %s220
      %p234 = scmp.eq.s32.totalorder %s29, 1
      %p235 = por %p233, %p234
      %p237 = scmp.ne.s32.totalorder %s220, %s236
      %p238 = scmp.eq.s32.totalorder %s29, 0
      %p239 = por %p237, %p238
      %s240 = ssub.s32 %s30, %s49
      %s241 = ssub.s32 %s31, %s45
      %s242 = sor.u32 %s240, %s241
      %p243 = scmp.eq.s32.totalorder %s242, 0
      %s245 = sadd.s32 %s244, 1
      %s246 = scalar_select %p243, %s244, %s245
      %p249 = pneg %p243
      %p250 = scmp.eq.s32.totalorder %s23, 1
      %p251 = por %p249, %p250
      %p252 = scmp.ne.s32.totalorder %s244, %s247
      %p253 = scmp.eq.s32.totalorder %s23, 0
      %p254 = por %p252, %p253
      %p255 = scmp.ne.s32.totalorder %s244, %s247
      %p256 = scmp.eq.s32.totalorder %s28, 1
      %p257 = por %p255, %p256
      %p258 = scmp.ne.s32.totalorder %s247, %s248
      %p259 = scmp.eq.s32.totalorder %s28, 0
      %p260 = por %p258, %p259
      %p261 = scmp.ne.s32.totalorder %s247, %s248
      %p262 = scmp.eq.s32.totalorder %s29, 1
      %p263 = por %p261, %p262
      %p265 = scmp.ne.s32.totalorder %s248, %s264
      %p266 = scmp.eq.s32.totalorder %s29, 0
      %p267 = por %p265, %p266
      %p268 = scmp.le.s32.totalorder 1, %s23
      %p269 = scmp.lt.s32.totalorder %s23, 3
      %p270 = pnand %p268, %p269
      %p271 = pneg %p270
      // Predicated region
      $region9: #{tpu_custom_call.1} parent=5 // pred_check
        _
      $region10: #{tpu_custom_call.1} parent=5 // pred_check_branch
        %273 = sbr.rel (%p270) target = $region12
      $region11: #{tpu_custom_call.1} parent=5 // pred_region
        %s274 = ssub.s32 %s23, 1
        // Predicated region
        $region13: #{tpu_custom_call.1} parent=11 // pred_check
          %p275 = pneg %p70
        $region14: #{tpu_custom_call.1} parent=11 // pred_check_branch
          %277 = sbr.rel (%p275) target = $region16
        $region15: #{tpu_custom_call.1} parent=11 // pred_region
          %s278 = smul.u32 2, %s33
          %s279 = smul.u32 2, %s35
          %s281 = ssub.s32 256, 256
          %282 = vsyncadd [#allocation4], %s281
          %s283 = smul.addr %s278, 2
          %s284 = sadd.s32 %s279, %s283
          %s285 = smul.addr %s284, 64
          %s286 = scalar_lea.hbm %s0, %s285
          %s287 = sshll.u32 [#allocation3], 4
          %s288 = int_to_ptr.vmem [resolvable:$true] %s287
          %293 = dma.hbm_to_vmem [thread:$0]  %s286, 256, %s288, [#allocation4], 128, 128, 8
        $region16: #{tpu_custom_call.1} parent=11 // pred_fallthru
          _
        // Predicated region
        $region17: #{tpu_custom_call.1} parent=11 // pred_check
          %p294 = pneg %p206
        $region18: #{tpu_custom_call.1} parent=11 // pred_check_branch
          %296 = sbr.rel (%p294) target = $region20
        $region19: #{tpu_custom_call.1} parent=11 // pred_region
          %s297 = smul.u32 2, %s33
          %p298 = scmp.lt.s32.totalorder %s297, 1
          %s299 = scalar_select %p298, %s297, 1
          %s300 = smul.addr %s299, 4
          %s301 = scalar_lea.vmem %s5, %s300
          %s302 = smul.u32 2, %s33
        $region20: #{tpu_custom_call.1} parent=11 // pred_fallthru
          _
      $region12: #{tpu_custom_call.1} parent=5 // pred_fallthru
        _
      %p303 = scmp.lt.s32.totalorder %s23, 2
      // Predicated region
      $region21: #{tpu_custom_call.1} parent=5 // pred_check
        %p304 = pneg %p303
      $region22: #{tpu_custom_call.1} parent=5 // pred_check_branch
        %306 = sbr.rel (%p304) target = $region24
      $region23: #{tpu_custom_call.1} parent=5 // pred_region
        // Predicated region
        $region25: #{tpu_custom_call.1} parent=23 // pred_check
          %p307 = pneg %p92
        $region26: #{tpu_custom_call.1} parent=23 // pred_check_branch
          %309 = sbr.rel (%p307) target = $region28
        $region27: #{tpu_custom_call.1} parent=23 // pred_region
          %s310 = sand.u32 %s23, 1
          %s311 = scalar_lea.sflag [#allocation7], %s310
          %s312 = sand.u32 %s82, 1
          %s313 = smul.addr %s312, 64
          %s314 = scalar_lea.vmem [#allocation6], %s313
          %s315 = smul.u32 4, %s32
          %s316 = smul.u32 2, %s31
          %s318 = ssub.s32 1024, 1024
          %319 = vsyncadd %s311, %s318
          %s320 = smul.addr %s315, 4
          %s321 = sadd.s32 %s316, %s320
          %s322 = smul.addr %s321, 128
          %s323 = scalar_lea.hbm %s1, %s322
          %s324 = sshll.u32 %s314, 4
          %s325 = int_to_ptr.vmem [resolvable:$true] %s324
          %330 = dma.hbm_to_vmem [thread:$0]  %s323, 1024, %s325, %s311, 512, 256, 16
        $region28: #{tpu_custom_call.1} parent=23 // pred_fallthru
          _
        // Predicated region
        $region29: #{tpu_custom_call.1} parent=23 // pred_check
          %p331 = pneg %p120
        $region30: #{tpu_custom_call.1} parent=23 // pred_check_branch
          %333 = sbr.rel (%p331) target = $region32
        $region31: #{tpu_custom_call.1} parent=23 // pred_region
          %s334 = sand.u32 %s23, 1
          %s335 = scalar_lea.sflag [#allocation7], %s334
          %s336 = sand.u32 %s110, 1
          %s337 = smul.addr %s336, 16
          %s338 = scalar_lea.vmem [#allocation8], %s337
          %s339 = smul.u32 2, %s31
          %s341 = ssub.s32 256, 256
          %342 = vsyncadd %s335, %s341
          %s343 = smul.addr %s32, 4
          %s344 = sadd.s32 %s339, %s343
          %s345 = smul.addr %s344, 128
          %s346 = scalar_lea.hbm %s2, %s345
          %s348 = sshll.u32 %s338, 4
          %s349 = int_to_ptr.vmem [resolvable:$true] %s348
          %351 = dma.hbm_to_vmem [thread:$0]  %s346, 256, %s349, %s335
        $region32: #{tpu_custom_call.1} parent=23 // pred_fallthru
          _
        // Predicated region
        $region33: #{tpu_custom_call.1} parent=23 // pred_check
          %p352 = pneg %p148
        $region34: #{tpu_custom_call.1} parent=23 // pred_check_branch
          %354 = sbr.rel (%p352) target = $region36
        $region35: #{tpu_custom_call.1} parent=23 // pred_region
          %s355 = sand.u32 %s23, 1
          %s356 = scalar_lea.sflag [#allocation10], %s355
          %s357 = sand.u32 %s138, 1
          %s358 = smul.addr %s357, 16
          %s359 = scalar_lea.vmem [#allocation9], %s358
          %s360 = smul.u32 2, %s31
          %s362 = ssub.s32 256, 256
          %363 = vsyncadd %s356, %s362
          %s364 = smul.addr %s32, 4
          %s365 = sadd.s32 %s360, %s364
          %s366 = smul.addr %s365, 128
          %s367 = scalar_lea.hbm %s3, %s366
          %s369 = sshll.u32 %s359, 4
          %s370 = int_to_ptr.vmem [resolvable:$true] %s369
          %372 = dma.hbm_to_vmem [thread:$0]  %s367, 256, %s370, %s356
        $region36: #{tpu_custom_call.1} parent=23 // pred_fallthru
          _
        // Predicated region
        $region37: #{tpu_custom_call.1} parent=23 // pred_check
          %p373 = pneg %p174
        $region38: #{tpu_custom_call.1} parent=23 // pred_check_branch
          %375 = sbr.rel (%p373) target = $region40
        $region39: #{tpu_custom_call.1} parent=23 // pred_region
          %s376 = smul.u32 2, %s31
          %p377 = scmp.lt.s32.totalorder %s376, 3
          %s378 = scalar_select %p377, %s376, 3
          %s379 = scalar_lea.vmem %s4, %s378
          %s380 = smul.u32 2, %s31
        $region40: #{tpu_custom_call.1} parent=23 // pred_fallthru
          _
        // Predicated region
        $region41: #{tpu_custom_call.1} parent=23 // pred_check
          %p381 = pneg %p226
        $region42: #{tpu_custom_call.1} parent=23 // pred_check_branch
          %383 = sbr.rel (%p381) target = $region44
        $region43: #{tpu_custom_call.1} parent=23 // pred_region
          %s384 = sand.u32 %s23, 1
          %s385 = scalar_lea.sflag [#allocation10], %s384
          %s386 = sand.u32 %s216, 1
          %s387 = smul.addr %s386, 16
          %s388 = scalar_lea.vmem [#allocation11], %s387
          %s389 = smul.u32 2, %s31
          %s391 = ssub.s32 256, 256
          %392 = vsyncadd %s385, %s391
          %s393 = smul.addr %s389, 64
          %s394 = scalar_lea.hbm %s6, %s393
          %s395 = sshll.u32 %s388, 4
          %s396 = int_to_ptr.vmem [resolvable:$true] %s395
          %401 = dma.hbm_to_vmem [thread:$0]  %s394, 256, %s396, %s385, 256, 128, 8
        $region44: #{tpu_custom_call.1} parent=23 // pred_fallthru
          _
      $region24: #{tpu_custom_call.1} parent=5 // pred_fallthru
        _
      %p402 = scmp.le.s32.totalorder 1, %s23
      %p403 = scmp.lt.s32.totalorder %s23, 3
      %p404 = pnand %p402, %p403
      %p405 = pneg %p404
      // Predicated region
      $region45: #{tpu_custom_call.1} parent=5 // pred_check
        _
      $region46: #{tpu_custom_call.1} parent=5 // pred_check_branch
        %407 = sbr.rel (%p404) target = $region48
      $region47: #{tpu_custom_call.1} parent=5 // pred_region
        %s408 = ssub.s32 %s23, 1
        // Predicated region
        $region49: #{tpu_custom_call.1} parent=47 // pred_check
          %p409 = pneg %p70
        $region50: #{tpu_custom_call.1} parent=47 // pred_check_branch
          %411 = sbr.rel (%p409) target = $region52
        $region51: #{tpu_custom_call.1} parent=47 // pred_region
          %412 = dma.done [#allocation4], 256
        $region52: #{tpu_custom_call.1} parent=47 // pred_fallthru
          _
        %s413 = sand.u32 %s28, 1
        %s414 = scalar_lea.sflag [#allocation7], %s413
        %s415 = sand.u32 %s85, 1
        %s416 = smul.addr %s415, 64
        %s417 = scalar_lea.vmem [#allocation6], %s416
        // Predicated region
        $region53: #{tpu_custom_call.1} parent=47 // pred_check
          %p418 = pneg %p98
        $region54: #{tpu_custom_call.1} parent=47 // pred_check_branch
          %420 = sbr.rel (%p418) target = $region56
        $region55: #{tpu_custom_call.1} parent=47 // pred_region
          %421 = dma.done %s414, 1024
        $region56: #{tpu_custom_call.1} parent=47 // pred_fallthru
          _
        %s422 = sand.u32 %s28, 1
        %s423 = scalar_lea.sflag [#allocation7], %s422
        %s424 = sand.u32 %s113, 1
        %s425 = smul.addr %s424, 16
        %s426 = scalar_lea.vmem [#allocation8], %s425
        // Predicated region
        $region57: #{tpu_custom_call.1} parent=47 // pred_check
          %p427 = pneg %p126
        $region58: #{tpu_custom_call.1} parent=47 // pred_check_branch
          %429 = sbr.rel (%p427) target = $region60
        $region59: #{tpu_custom_call.1} parent=47 // pred_region
          %430 = dma.done %s423, 256
        $region60: #{tpu_custom_call.1} parent=47 // pred_fallthru
          _
        %s431 = sand.u32 %s28, 1
        %s432 = scalar_lea.sflag [#allocation10], %s431
        %s433 = sand.u32 %s141, 1
        %s434 = smul.addr %s433, 16
        %s435 = scalar_lea.vmem [#allocation9], %s434
        // Predicated region
        $region61: #{tpu_custom_call.1} parent=47 // pred_check
          %p436 = pneg %p154
        $region62: #{tpu_custom_call.1} parent=47 // pred_check_branch
          %438 = sbr.rel (%p436) target = $region64
        $region63: #{tpu_custom_call.1} parent=47 // pred_region
          %439 = dma.done %s432, 256
        $region64: #{tpu_custom_call.1} parent=47 // pred_fallthru
          _
        %s440 = sand.u32 %s28, 1
        %s441 = scalar_lea.sflag [#allocation10], %s440
        %s442 = sand.u32 %s219, 1
        %s443 = smul.addr %s442, 16
        %s444 = scalar_lea.vmem [#allocation11], %s443
        // Predicated region
        $region65: #{tpu_custom_call.1} parent=47 // pred_check
          %p445 = pneg %p232
        $region66: #{tpu_custom_call.1} parent=47 // pred_check_branch
          %447 = sbr.rel (%p445) target = $region68
        $region67: #{tpu_custom_call.1} parent=47 // pred_region
          %448 = dma.done %s441, 256
        $region68: #{tpu_custom_call.1} parent=47 // pred_fallthru
          _
        %p449 = pneg %p70
        %p450 = pneg %p67
        %s451 = sand.u32 %s28, 1
        %s452 = scalar_lea.sflag [#allocation7], %s451
        %s453 = sand.u32 %s85, 1
        %s454 = smul.addr %s453, 64
        %s455 = scalar_lea.vmem [#allocation6], %s454
        %p456 = pneg %p98
        %p457 = pneg %p95
        %s458 = sand.u32 %s28, 1
        %s459 = scalar_lea.sflag [#allocation7], %s458
        %s460 = sand.u32 %s113, 1
        %s461 = smul.addr %s460, 16
        %s462 = scalar_lea.vmem [#allocation8], %s461
        %p463 = pneg %p126
        %p464 = pneg %p123
        %s465 = sand.u32 %s28, 1
        %s466 = scalar_lea.sflag [#allocation10], %s465
        %s467 = sand.u32 %s141, 1
        %s468 = smul.addr %s467, 16
        %s469 = scalar_lea.vmem [#allocation9], %s468
        %p470 = pneg %p154
        %p471 = pneg %p151
        %s472 = smul.u32 2, %s34
        %p473 = scmp.lt.s32.totalorder %s472, 3
        %s474 = scalar_select %p473, %s472, 3
        %s475 = scalar_lea.vmem %s4, %s474
        %p476 = pneg %p180
        %p477 = pneg %p177
        %s478 = smul.u32 2, %s33
        %p479 = scmp.lt.s32.totalorder %s478, 1
        %s480 = scalar_select %p479, %s478, 1
        %s481 = smul.addr %s480, 4
        %s482 = scalar_lea.vmem %s5, %s481
        %p483 = pneg %p206
        %p484 = pneg %p203
        %s485 = sand.u32 %s28, 1
        %s486 = scalar_lea.sflag [#allocation10], %s485
        %s487 = sand.u32 %s219, 1
        %s488 = smul.addr %s487, 16
        %s489 = scalar_lea.vmem [#allocation11], %s488
        %p490 = pneg %p232
        %p491 = pneg %p229
        %p492 = pneg %p260
        %p493 = pneg %p257
        %s494 = sand.u32 %s247, 1
        %s495 = scalar_lea.sflag [#allocation5], %s494
        %s496 = sand.u32 %s247, 1
        %s497 = smul.addr %s496, 32
        %s498 = scalar_lea.vmem [#allocation12], %s497
        %s499 = smul.u32 2, %s33
        %s500 = smul.u32 2, %s35
        %s501 = smul.u32 4, %s35
        %s502 = smul.u32 2, %s34
        %s503 = smul.u32 2, %s34
        %s504 = smul.u32 2, %s34
        %s505 = smul.u32 2, %s34
        %p506 = scmp.lt.s32.totalorder %s505, 3
        %s507 = scalar_select %p506, %s505, 3
        %s508 = scalar_lea.vmem %s4, %s507
        %s509 = smul.u32 2, %s34
        %s510 = smul.u32 2, %s33
        %p511 = scmp.lt.s32.totalorder %s510, 1
        %s512 = scalar_select %p511, %s510, 1
        %s513 = smul.addr %s512, 4
        %s514 = scalar_lea.vmem %s5, %s513
        %s515 = smul.u32 2, %s33
        %s516 = smul.u32 2, %s34
        %s517 = smul.u32 2, %s33
        %s518 = smul.u32 2, %s34
        %p520 = scmp.eq.s32.totalorder %s35, 0
        // Predicated region
        $region69: #{tpu_custom_call.1} parent=47 // pred_check
          %p521 = pneg %p520
        $region70: #{tpu_custom_call.1} parent=47 // pred_check_branch
          %523 = sbr.rel (%p521) target = $region72
        $region71: #{tpu_custom_call.1} parent=47 // pred_region
          %v524 = vld [vmem:[%s514] sm:$0xf]
          %v525 = vld [vmem:[%s514 + $0x4] sm:$0xf]
          %v526 = vld [vmem:[%s444] sm:$0xff]
          %v527 = vld [vmem:[%s444 + $0x8] sm:$0xff]
          %v528 = vld [vmem:[%s508] sm:$0x3]
          %v530 = vlaneseq
          %v531 = vshrl.u32 %v530, 7
          %v532 = vsub.s32 0, %v531
          %v533 = vrot.slane %v528, %v532
          %v534 = vlaneseq
          %v535 = vshrl.u32 %v534, 7
          %v536 = vsub.s32 1, %v535
          %v537 = vrot.slane %v528, %v536
          %v542 = vunpack.c.l.b16 %v524
          %v543 = vunpack.c.l.b16 %v525
          %v544 = vpack.c.b16 %v543, %v542
          %v547 = vunpack.c.l.b16 %v526
          %v548 = vunpack.c.h.b16 %v526
          %v549 = vunpack.c.l.b16 %v527
          %v550 = vunpack.c.h.b16 %v527
          %v551 = vpack.c.b16 %v549, %v547
          %v552 = vpack.c.b16 %v550, %v548
          %vm555 = vcmask 130048
          %v557 = vsel %vm555, %v544, 0
          %559 = vmatprep.subr.bf16.mxu0 %v552
          %560 = vmatpush1.bf16.msra.mxu0 %v551
          %561 = vmatprep.subr.bf16.mxu0 0
          %562 = vmatpush1.bf16.msra.mxu0 0
          %563 = vmatprep.subr.bf16.mxu0 0
          %564 = vmatpush1.bf16.msra.mxu0 0
          %565 = vmatprep.subr.bf16.mxu0 0
          %566 = vmatpush1.bf16.msra.mxu0 0
          %567 = vmatprep.subr.bf16.mxu0 0
          %568 = vmatpush1.bf16.msra.mxu0 0
          %569 = vmatprep.subr.bf16.mxu0 0
          %570 = vmatpush1.bf16.msra.mxu0 0
          %571 = vmatprep.subr.bf16.mxu0 0
          %572 = vmatpush1.bf16.msra.mxu0 0
          %573 = vmatprep.subr.bf16.mxu0 0
          %574 = vmatpush1.bf16.msra.mxu0 0
          %575 = vmatprep.subr.bf16.mxu0 0
          %576 = vmatpush1.bf16.msra.mxu0 0
          %577 = vmatprep.subr.bf16.mxu0 0
          %578 = vmatpush1.bf16.msra.mxu0 0
          %579 = vmatprep.subr.bf16.mxu0 0
          %580 = vmatpush1.bf16.msra.mxu0 0
          %581 = vmatprep.subr.bf16.mxu0 0
          %582 = vmatpush1.bf16.msra.mxu0 0
          %583 = vmatprep.subr.bf16.mxu0 0
          %584 = vmatpush1.bf16.msra.mxu0 0
          %585 = vmatprep.subr.bf16.mxu0 0
          %586 = vmatpush1.bf16.msra.mxu0 0
          %587 = vmatprep.subr.bf16.mxu0 0
          %588 = vmatpush1.bf16.msra.mxu0 0
          %589 = vmatprep.subr.bf16.mxu0 0
          %590 = vmatpush1.bf16.msra.mxu0 0
          %591 = vmatprep.mubr.bf16.mxu0 0
          %592 = vmatmul.mubr.bf16.gmra.mrb[0].mxu0 %v557
          %v593 = vpop.f32.mrb[0].mxu0
          %v594 = vadd.f32 %v533, %v593
          %v595 = vpop.f32.mrb[0].mxu0
          %v596 = vadd.f32 %v537, %v595
          %v597 = vpop.f32.mrb[0].mxu0
          %v598 = vadd.f32 %v533, %v597
          %v599 = vpop.f32.mrb[0].mxu0
          %v600 = vadd.f32 %v537, %v599
          %601 = vdwg.mxu0
          %602 = vst [vmem:[#allocation2] sm:$0xff] %v594
          %603 = vst [vmem:[#allocation2 + $0x8] sm:$0xff] %v596
          %604 = vst [vmem:[#allocation2 + $0x10] sm:$0xff] %v598
          %605 = vst [vmem:[#allocation2 + $0x18] sm:$0xff] %v600
        $region72: #{tpu_custom_call.1} parent=47 // pred_fallthru
          _
        %v606 = vld [vmem:[%s417] sm:$0xff]
        %v607 = vld [vmem:[%s417 + $0x8] sm:$0xff]
        %v608 = vld [vmem:[%s417 + $0x10] sm:$0xff]
        %v609 = vld [vmem:[%s417 + $0x18] sm:$0xff]
        %v610 = vld [vmem:[%s417 + $0x20] sm:$0xff]
        %v611 = vld [vmem:[%s417 + $0x28] sm:$0xff]
        %v612 = vld [vmem:[%s417 + $0x30] sm:$0xff]
        %v613 = vld [vmem:[%s417 + $0x38] sm:$0xff]
        %v614 = vunpack.c.0.s8 %v606
        %v615 = vunpack.c.0.s8 %v607
        %v616 = vunpack.c.1.s8 %v606
        %v617 = vunpack.c.1.s8 %v607
        %v618 = vunpack.c.2.s8 %v606
        %v619 = vunpack.c.2.s8 %v607
        %v620 = vunpack.c.3.s8 %v606
        %v621 = vunpack.c.3.s8 %v607
        %v622 = vunpack.c.0.s8 %v608
        %v623 = vunpack.c.0.s8 %v609
        %v624 = vunpack.c.1.s8 %v608
        %v625 = vunpack.c.1.s8 %v609
        %v626 = vunpack.c.2.s8 %v608
        %v627 = vunpack.c.2.s8 %v609
        %v628 = vunpack.c.3.s8 %v608
        %v629 = vunpack.c.3.s8 %v609
        %v630 = vunpack.c.0.s8 %v610
        %v631 = vunpack.c.0.s8 %v611
        %v632 = vunpack.c.1.s8 %v610
        %v633 = vunpack.c.1.s8 %v611
        %v634 = vunpack.c.2.s8 %v610
        %v635 = vunpack.c.2.s8 %v611
        %v636 = vunpack.c.3.s8 %v610
        %v637 = vunpack.c.3.s8 %v611
        %v638 = vunpack.c.0.s8 %v612
        %v639 = vunpack.c.0.s8 %v613
        %v640 = vunpack.c.1.s8 %v612
        %v641 = vunpack.c.1.s8 %v613
        %v642 = vunpack.c.2.s8 %v612
        %v643 = vunpack.c.2.s8 %v613
        %v644 = vunpack.c.3.s8 %v612
        %v645 = vunpack.c.3.s8 %v613
        %v646 = vand.u32 %v614, 15
        %v647 = vand.u32 %v615, 15
        %v648 = vand.u32 %v616, 15
        %v649 = vand.u32 %v617, 15
        %v650 = vand.u32 %v618, 15
        %v651 = vand.u32 %v619, 15
        %v652 = vand.u32 %v620, 15
        %v653 = vand.u32 %v621, 15
        %v654 = vand.u32 %v622, 15
        %v655 = vand.u32 %v623, 15
        %v656 = vand.u32 %v624, 15
        %v657 = vand.u32 %v625, 15
        %v658 = vand.u32 %v626, 15
        %v659 = vand.u32 %v627, 15
        %v660 = vand.u32 %v628, 15
        %v661 = vand.u32 %v629, 15
        %v662 = vand.u32 %v630, 15
        %v663 = vand.u32 %v631, 15
        %v664 = vand.u32 %v632, 15
        %v665 = vand.u32 %v633, 15
        %v666 = vand.u32 %v634, 15
        %v667 = vand.u32 %v635, 15
        %v668 = vand.u32 %v636, 15
        %v669 = vand.u32 %v637, 15
        %v670 = vand.u32 %v638, 15
        %v671 = vand.u32 %v639, 15
        %v672 = vand.u32 %v640, 15
        %v673 = vand.u32 %v641, 15
        %v674 = vand.u32 %v642, 15
        %v675 = vand.u32 %v643, 15
        %v676 = vand.u32 %v644, 15
        %v677 = vand.u32 %v645, 15
        %v678 = vcvt.s32.f32 %v646
        %v679 = vcvt.s32.f32 %v647
        %v680 = vcvt.s32.f32 %v648
        %v681 = vcvt.s32.f32 %v649
        %v682 = vcvt.s32.f32 %v650
        %v683 = vcvt.s32.f32 %v651
        %v684 = vcvt.s32.f32 %v652
        %v685 = vcvt.s32.f32 %v653
        %v686 = vcvt.s32.f32 %v654
        %v687 = vcvt.s32.f32 %v655
        %v688 = vcvt.s32.f32 %v656
        %v689 = vcvt.s32.f32 %v657
        %v690 = vcvt.s32.f32 %v658
        %v691 = vcvt.s32.f32 %v659
        %v692 = vcvt.s32.f32 %v660
        %v693 = vcvt.s32.f32 %v661
        %v694 = vcvt.s32.f32 %v662
        %v695 = vcvt.s32.f32 %v663
        %v696 = vcvt.s32.f32 %v664
        %v697 = vcvt.s32.f32 %v665
        %v698 = vcvt.s32.f32 %v666
        %v699 = vcvt.s32.f32 %v667
        %v700 = vcvt.s32.f32 %v668
        %v701 = vcvt.s32.f32 %v669
        %v702 = vcvt.s32.f32 %v670
        %v703 = vcvt.s32.f32 %v671
        %v704 = vcvt.s32.f32 %v672
        %v705 = vcvt.s32.f32 %v673
        %v706 = vcvt.s32.f32 %v674
        %v707 = vcvt.s32.f32 %v675
        %v708 = vcvt.s32.f32 %v676
        %v709 = vcvt.s32.f32 %v677
        %v710 = vshra.s32 %v614, 4
        %v711 = vshra.s32 %v615, 4
        %v712 = vshra.s32 %v616, 4
        %v713 = vshra.s32 %v617, 4
        %v714 = vshra.s32 %v618, 4
        %v715 = vshra.s32 %v619, 4
        %v716 = vshra.s32 %v620, 4
        %v717 = vshra.s32 %v621, 4
        %v718 = vshra.s32 %v622, 4
        %v719 = vshra.s32 %v623, 4
        %v720 = vshra.s32 %v624, 4
        %v721 = vshra.s32 %v625, 4
        %v722 = vshra.s32 %v626, 4
        %v723 = vshra.s32 %v627, 4
        %v724 = vshra.s32 %v628, 4
        %v725 = vshra.s32 %v629, 4
        %v726 = vshra.s32 %v630, 4
        %v727 = vshra.s32 %v631, 4
        %v728 = vshra.s32 %v632, 4
        %v729 = vshra.s32 %v633, 4
        %v730 = vshra.s32 %v634, 4
        %v731 = vshra.s32 %v635, 4
        %v732 = vshra.s32 %v636, 4
        %v733 = vshra.s32 %v637, 4
        %v734 = vshra.s32 %v638, 4
        %v735 = vshra.s32 %v639, 4
        %v736 = vshra.s32 %v640, 4
        %v737 = vshra.s32 %v641, 4
        %v738 = vshra.s32 %v642, 4
        %v739 = vshra.s32 %v643, 4
        %v740 = vshra.s32 %v644, 4
        %v741 = vshra.s32 %v645, 4
        %v742 = vand.u32 %v710, 15
        %v743 = vand.u32 %v711, 15
        %v744 = vand.u32 %v712, 15
        %v745 = vand.u32 %v713, 15
        %v746 = vand.u32 %v714, 15
        %v747 = vand.u32 %v715, 15
        %v748 = vand.u32 %v716, 15
        %v749 = vand.u32 %v717, 15
        %v750 = vand.u32 %v718, 15
        %v751 = vand.u32 %v719, 15
        %v752 = vand.u32 %v720, 15
        %v753 = vand.u32 %v721, 15
        %v754 = vand.u32 %v722, 15
        %v755 = vand.u32 %v723, 15
        %v756 = vand.u32 %v724, 15
        %v757 = vand.u32 %v725, 15
        %v758 = vand.u32 %v726, 15
        %v759 = vand.u32 %v727, 15
        %v760 = vand.u32 %v728, 15
        %v761 = vand.u32 %v729, 15
        %v762 = vand.u32 %v730, 15
        %v763 = vand.u32 %v731, 15
        %v764 = vand.u32 %v732, 15
        %v765 = vand.u32 %v733, 15
        %v766 = vand.u32 %v734, 15
        %v767 = vand.u32 %v735, 15
        %v768 = vand.u32 %v736, 15
        %v769 = vand.u32 %v737, 15
        %v770 = vand.u32 %v738, 15
        %v771 = vand.u32 %v739, 15
        %v772 = vand.u32 %v740, 15
        %v773 = vand.u32 %v741, 15
        %v774 = vcvt.s32.f32 %v742
        %v775 = vcvt.s32.f32 %v743
        %v776 = vcvt.s32.f32 %v744
        %v777 = vcvt.s32.f32 %v745
        %v778 = vcvt.s32.f32 %v746
        %v779 = vcvt.s32.f32 %v747
        %v780 = vcvt.s32.f32 %v748
        %v781 = vcvt.s32.f32 %v749
        %v782 = vcvt.s32.f32 %v750
        %v783 = vcvt.s32.f32 %v751
        %v784 = vcvt.s32.f32 %v752
        %v785 = vcvt.s32.f32 %v753
        %v786 = vcvt.s32.f32 %v754
        %v787 = vcvt.s32.f32 %v755
        %v788 = vcvt.s32.f32 %v756
        %v789 = vcvt.s32.f32 %v757
        %v790 = vcvt.s32.f32 %v758
        %v791 = vcvt.s32.f32 %v759
        %v792 = vcvt.s32.f32 %v760
        %v793 = vcvt.s32.f32 %v761
        %v794 = vcvt.s32.f32 %v762
        %v795 = vcvt.s32.f32 %v763
        %v796 = vcvt.s32.f32 %v764
        %v797 = vcvt.s32.f32 %v765
        %v798 = vcvt.s32.f32 %v766
        %v799 = vcvt.s32.f32 %v767
        %v800 = vcvt.s32.f32 %v768
        %v801 = vcvt.s32.f32 %v769
        %v802 = vcvt.s32.f32 %v770
        %v803 = vcvt.s32.f32 %v771
        %v804 = vcvt.s32.f32 %v772
        %v805 = vcvt.s32.f32 %v773
        %v806 = vld [vmem:[%s426] sm:$0xff]
        %v807 = vld [vmem:[%s426 + $0x8] sm:$0xff]
        %v808 = vld [vmem:[%s435] sm:$0xff]
        %v809 = vld [vmem:[%s435 + $0x8] sm:$0xff]
        %v812 = vcombine.low %v808, %v809
        %v814 = vunpack.c.l.s4 1966171168
        %v815 = vunpack.c.0.s8 %v814
        %v816 = vlaneseq
        %v817 = vshrl.u32 %v816, 7
        %v818 = vsub.s32 %v815, %v817
        %v819 = vrot.slane %v812, %v818
        %v820 = vcombine.high %v819, %v819
        %v822 = vunpack.c.l.s4 1966171168
        %v823 = vunpack.c.0.s8 %v822
        %v824 = vlaneseq
        %v825 = vshrl.u32 %v824, 7
        %v826 = vsub.s32 %v823, %v825
        %v827 = vrot.slane %v819, %v826
        %v829 = vunpack.c.l.s4 1966171168
        %v830 = vunpack.c.0.s8 %v829
        %v831 = vlaneseq
        %v832 = vshrl.u32 %v831, 7
        %v833 = vsub.s32 %v830, %v832
        %v834 = vrot.slane %v820, %v833
        %v835 = vcombine.high %v827, %v827
        %v836 = vcombine.high %v834, %v834
        %v837 = vlaneseq
        %v838 = vshrl.u32 %v837, 7
        %v839 = vsub.s32 0, %v838
        %v840 = vrot.slane %v827, %v839
        %v841 = vlaneseq
        %v842 = vshrl.u32 %v841, 7
        %v843 = vsub.s32 1, %v842
        %v844 = vrot.slane %v827, %v843
        %v845 = vlaneseq
        %v846 = vshrl.u32 %v845, 7
        %v847 = vsub.s32 0, %v846
        %v848 = vrot.slane %v834, %v847
        %v849 = vlaneseq
        %v850 = vshrl.u32 %v849, 7
        %v851 = vsub.s32 1, %v850
        %v852 = vrot.slane %v834, %v851
        %v853 = vlaneseq
        %v854 = vshrl.u32 %v853, 7
        %v855 = vsub.s32 0, %v854
        %v856 = vrot.slane %v835, %v855
        %v857 = vlaneseq
        %v858 = vshrl.u32 %v857, 7
        %v859 = vsub.s32 1, %v858
        %v860 = vrot.slane %v835, %v859
        %v861 = vlaneseq
        %v862 = vshrl.u32 %v861, 7
        %v863 = vsub.s32 0, %v862
        %v864 = vrot.slane %v836, %v863
        %v865 = vlaneseq
        %v866 = vshrl.u32 %v865, 7
        %v867 = vsub.s32 1, %v866
        %v868 = vrot.slane %v836, %v867
        %v877 = vsub.f32 %v678, %v840
        %v878 = vsub.f32 %v679, %v844
        %v879 = vsub.f32 %v680, %v840
        %v880 = vsub.f32 %v681, %v844
        %v881 = vsub.f32 %v682, %v840
        %v882 = vsub.f32 %v683, %v844
        %v883 = vsub.f32 %v684, %v840
        %v884 = vsub.f32 %v685, %v844
        %v885 = vsub.f32 %v686, %v848
        %v886 = vsub.f32 %v687, %v852
        %v887 = vsub.f32 %v688, %v848
        %v888 = vsub.f32 %v689, %v852
        %v889 = vsub.f32 %v690, %v848
        %v890 = vsub.f32 %v691, %v852
        %v891 = vsub.f32 %v692, %v848
        %v892 = vsub.f32 %v693, %v852
        %v893 = vsub.f32 %v694, %v856
        %v894 = vsub.f32 %v695, %v860
        %v895 = vsub.f32 %v696, %v856
        %v896 = vsub.f32 %v697, %v860
        %v897 = vsub.f32 %v698, %v856
        %v898 = vsub.f32 %v699, %v860
        %v899 = vsub.f32 %v700, %v856
        %v900 = vsub.f32 %v701, %v860
        %v901 = vsub.f32 %v702, %v864
        %v902 = vsub.f32 %v703, %v868
        %v903 = vsub.f32 %v704, %v864
        %v904 = vsub.f32 %v705, %v868
        %v905 = vsub.f32 %v706, %v864
        %v906 = vsub.f32 %v707, %v868
        %v907 = vsub.f32 %v708, %v864
        %v908 = vsub.f32 %v709, %v868
        %v911 = vcombine.low %v806, %v807
        %v913 = vunpack.c.l.s4 1966171168
        %v914 = vunpack.c.0.s8 %v913
        %v915 = vlaneseq
        %v916 = vshrl.u32 %v915, 7
        %v917 = vsub.s32 %v914, %v916
        %v918 = vrot.slane %v911, %v917
        %v919 = vcombine.high %v918, %v918
        %v921 = vunpack.c.l.s4 1966171168
        %v922 = vunpack.c.0.s8 %v921
        %v923 = vlaneseq
        %v924 = vshrl.u32 %v923, 7
        %v925 = vsub.s32 %v922, %v924
        %v926 = vrot.slane %v918, %v925
        %v928 = vunpack.c.l.s4 1966171168
        %v929 = vunpack.c.0.s8 %v928
        %v930 = vlaneseq
        %v931 = vshrl.u32 %v930, 7
        %v932 = vsub.s32 %v929, %v931
        %v933 = vrot.slane %v919, %v932
        %v934 = vcombine.high %v926, %v926
        %v935 = vcombine.high %v933, %v933
        %v936 = vlaneseq
        %v937 = vshrl.u32 %v936, 7
        %v938 = vsub.s32 0, %v937
        %v939 = vrot.slane %v926, %v938
        %v940 = vlaneseq
        %v941 = vshrl.u32 %v940, 7
        %v942 = vsub.s32 1, %v941
        %v943 = vrot.slane %v926, %v942
        %v944 = vlaneseq
        %v945 = vshrl.u32 %v944, 7
        %v946 = vsub.s32 0, %v945
        %v947 = vrot.slane %v933, %v946
        %v948 = vlaneseq
        %v949 = vshrl.u32 %v948, 7
        %v950 = vsub.s32 1, %v949
        %v951 = vrot.slane %v933, %v950
        %v952 = vlaneseq
        %v953 = vshrl.u32 %v952, 7
        %v954 = vsub.s32 0, %v953
        %v955 = vrot.slane %v934, %v954
        %v956 = vlaneseq
        %v957 = vshrl.u32 %v956, 7
        %v958 = vsub.s32 1, %v957
        %v959 = vrot.slane %v934, %v958
        %v960 = vlaneseq
        %v961 = vshrl.u32 %v960, 7
        %v962 = vsub.s32 0, %v961
        %v963 = vrot.slane %v935, %v962
        %v964 = vlaneseq
        %v965 = vshrl.u32 %v964, 7
        %v966 = vsub.s32 1, %v965
        %v967 = vrot.slane %v935, %v966
        %v976 = vmul.f32 %v877, %v939
        %v977 = vmul.f32 %v878, %v943
        %v978 = vmul.f32 %v879, %v939
        %v979 = vmul.f32 %v880, %v943
        %v980 = vmul.f32 %v881, %v939
        %v981 = vmul.f32 %v882, %v943
        %v982 = vmul.f32 %v883, %v939
        %v983 = vmul.f32 %v884, %v943
        %v984 = vmul.f32 %v885, %v947
        %v985 = vmul.f32 %v886, %v951
        %v986 = vmul.f32 %v887, %v947
        %v987 = vmul.f32 %v888, %v951
        %v988 = vmul.f32 %v889, %v947
        %v989 = vmul.f32 %v890, %v951
        %v990 = vmul.f32 %v891, %v947
        %v991 = vmul.f32 %v892, %v951
        %v992 = vmul.f32 %v893, %v955
        %v993 = vmul.f32 %v894, %v959
        %v994 = vmul.f32 %v895, %v955
        %v995 = vmul.f32 %v896, %v959
        %v996 = vmul.f32 %v897, %v955
        %v997 = vmul.f32 %v898, %v959
        %v998 = vmul.f32 %v899, %v955
        %v999 = vmul.f32 %v900, %v959
        %v1000 = vmul.f32 %v901, %v963
        %v1001 = vmul.f32 %v902, %v967
        %v1002 = vmul.f32 %v903, %v963
        %v1003 = vmul.f32 %v904, %v967
        %v1004 = vmul.f32 %v905, %v963
        %v1005 = vmul.f32 %v906, %v967
        %v1006 = vmul.f32 %v907, %v963
        %v1007 = vmul.f32 %v908, %v967
        %v1008 = vpack.c.bf16 %v978, %v976
        %v1009 = vpack.c.bf16 %v979, %v977
        %v1010 = vpack.c.bf16 %v982, %v980
        %v1011 = vpack.c.bf16 %v983, %v981
        %v1012 = vpack.c.bf16 %v986, %v984
        %v1013 = vpack.c.bf16 %v987, %v985
        %v1014 = vpack.c.bf16 %v990, %v988
        %v1015 = vpack.c.bf16 %v991, %v989
        %v1016 = vpack.c.bf16 %v994, %v992
        %v1017 = vpack.c.bf16 %v995, %v993
        %v1018 = vpack.c.bf16 %v998, %v996
        %v1019 = vpack.c.bf16 %v999, %v997
        %v1020 = vpack.c.bf16 %v1002, %v1000
        %v1021 = vpack.c.bf16 %v1003, %v1001
        %v1022 = vpack.c.bf16 %v1006, %v1004
        %v1023 = vpack.c.bf16 %v1007, %v1005
        %v1024 = vcombine.high %v808, %v809
        %v1026 = vunpack.c.l.s4 1966171168
        %v1027 = vunpack.c.0.s8 %v1026
        %v1028 = vlaneseq
        %v1029 = vshrl.u32 %v1028, 7
        %v1030 = vsub.s32 %v1027, %v1029
        %v1031 = vrot.slane %v1024, %v1030
        %v1032 = vcombine.high %v1031, %v1031
        %v1034 = vunpack.c.l.s4 1966171168
        %v1035 = vunpack.c.0.s8 %v1034
        %v1036 = vlaneseq
        %v1037 = vshrl.u32 %v1036, 7
        %v1038 = vsub.s32 %v1035, %v1037
        %v1039 = vrot.slane %v1031, %v1038
        %v1041 = vunpack.c.l.s4 1966171168
        %v1042 = vunpack.c.0.s8 %v1041
        %v1043 = vlaneseq
        %v1044 = vshrl.u32 %v1043, 7
        %v1045 = vsub.s32 %v1042, %v1044
        %v1046 = vrot.slane %v1032, %v1045
        %v1047 = vcombine.high %v1039, %v1039
        %v1048 = vcombine.high %v1046, %v1046
        %v1049 = vlaneseq
        %v1050 = vshrl.u32 %v1049, 7
        %v1051 = vsub.s32 0, %v1050
        %v1052 = vrot.slane %v1039, %v1051
        %v1053 = vlaneseq
        %v1054 = vshrl.u32 %v1053, 7
        %v1055 = vsub.s32 1, %v1054
        %v1056 = vrot.slane %v1039, %v1055
        %v1057 = vlaneseq
        %v1058 = vshrl.u32 %v1057, 7
        %v1059 = vsub.s32 0, %v1058
        %v1060 = vrot.slane %v1046, %v1059
        %v1061 = vlaneseq
        %v1062 = vshrl.u32 %v1061, 7
        %v1063 = vsub.s32 1, %v1062
        %v1064 = vrot.slane %v1046, %v1063
        %v1065 = vlaneseq
        %v1066 = vshrl.u32 %v1065, 7
        %v1067 = vsub.s32 0, %v1066
        %v1068 = vrot.slane %v1047, %v1067
        %v1069 = vlaneseq
        %v1070 = vshrl.u32 %v1069, 7
        %v1071 = vsub.s32 1, %v1070
        %v1072 = vrot.slane %v1047, %v1071
        %v1073 = vlaneseq
        %v1074 = vshrl.u32 %v1073, 7
        %v1075 = vsub.s32 0, %v1074
        %v1076 = vrot.slane %v1048, %v1075
        %v1077 = vlaneseq
        %v1078 = vshrl.u32 %v1077, 7
        %v1079 = vsub.s32 1, %v1078
        %v1080 = vrot.slane %v1048, %v1079
        %v1089 = vsub.f32 %v774, %v1052
        %v1090 = vsub.f32 %v775, %v1056
        %v1091 = vsub.f32 %v776, %v1052
        %v1092 = vsub.f32 %v777, %v1056
        %v1093 = vsub.f32 %v778, %v1052
        %v1094 = vsub.f32 %v779, %v1056
        %v1095 = vsub.f32 %v780, %v1052
        %v1096 = vsub.f32 %v781, %v1056
        %v1097 = vsub.f32 %v782, %v1060
        %v1098 = vsub.f32 %v783, %v1064
        %v1099 = vsub.f32 %v784, %v1060
        %v1100 = vsub.f32 %v785, %v1064
        %v1101 = vsub.f32 %v786, %v1060
        %v1102 = vsub.f32 %v787, %v1064
        %v1103 = vsub.f32 %v788, %v1060
        %v1104 = vsub.f32 %v789, %v1064
        %v1105 = vsub.f32 %v790, %v1068
        %v1106 = vsub.f32 %v791, %v1072
        %v1107 = vsub.f32 %v792, %v1068
        %v1108 = vsub.f32 %v793, %v1072
        %v1109 = vsub.f32 %v794, %v1068
        %v1110 = vsub.f32 %v795, %v1072
        %v1111 = vsub.f32 %v796, %v1068
        %v1112 = vsub.f32 %v797, %v1072
        %v1113 = vsub.f32 %v798, %v1076
        %v1114 = vsub.f32 %v799, %v1080
        %v1115 = vsub.f32 %v800, %v1076
        %v1116 = vsub.f32 %v801, %v1080
        %v1117 = vsub.f32 %v802, %v1076
        %v1118 = vsub.f32 %v803, %v1080
        %v1119 = vsub.f32 %v804, %v1076
        %v1120 = vsub.f32 %v805, %v1080
        %v1121 = vcombine.high %v806, %v807
        %v1123 = vunpack.c.l.s4 1966171168
        %v1124 = vunpack.c.0.s8 %v1123
        %v1125 = vlaneseq
        %v1126 = vshrl.u32 %v1125, 7
        %v1127 = vsub.s32 %v1124, %v1126
        %v1128 = vrot.slane %v1121, %v1127
        %v1129 = vcombine.high %v1128, %v1128
        %v1131 = vunpack.c.l.s4 1966171168
        %v1132 = vunpack.c.0.s8 %v1131
        %v1133 = vlaneseq
        %v1134 = vshrl.u32 %v1133, 7
        %v1135 = vsub.s32 %v1132, %v1134
        %v1136 = vrot.slane %v1128, %v1135
        %v1138 = vunpack.c.l.s4 1966171168
        %v1139 = vunpack.c.0.s8 %v1138
        %v1140 = vlaneseq
        %v1141 = vshrl.u32 %v1140, 7
        %v1142 = vsub.s32 %v1139, %v1141
        %v1143 = vrot.slane %v1129, %v1142
        %v1144 = vcombine.high %v1136, %v1136
        %v1145 = vcombine.high %v1143, %v1143
        %v1146 = vlaneseq
        %v1147 = vshrl.u32 %v1146, 7
        %v1148 = vsub.s32 0, %v1147
        %v1149 = vrot.slane %v1136, %v1148
        %v1150 = vlaneseq
        %v1151 = vshrl.u32 %v1150, 7
        %v1152 = vsub.s32 1, %v1151
        %v1153 = vrot.slane %v1136, %v1152
        %v1154 = vlaneseq
        %v1155 = vshrl.u32 %v1154, 7
        %v1156 = vsub.s32 0, %v1155
        %v1157 = vrot.slane %v1143, %v1156
        %v1158 = vlaneseq
        %v1159 = vshrl.u32 %v1158, 7
        %v1160 = vsub.s32 1, %v1159
        %v1161 = vrot.slane %v1143, %v1160
        %v1162 = vlaneseq
        %v1163 = vshrl.u32 %v1162, 7
        %v1164 = vsub.s32 0, %v1163
        %v1165 = vrot.slane %v1144, %v1164
        %v1166 = vlaneseq
        %v1167 = vshrl.u32 %v1166, 7
        %v1168 = vsub.s32 1, %v1167
        %v1169 = vrot.slane %v1144, %v1168
        %v1170 = vlaneseq
        %v1171 = vshrl.u32 %v1170, 7
        %v1172 = vsub.s32 0, %v1171
        %v1173 = vrot.slane %v1145, %v1172
        %v1174 = vlaneseq
        %v1175 = vshrl.u32 %v1174, 7
        %v1176 = vsub.s32 1, %v1175
        %v1177 = vrot.slane %v1145, %v1176
        %v1186 = vmul.f32 %v1089, %v1149
        %v1187 = vmul.f32 %v1090, %v1153
        %v1188 = vmul.f32 %v1091, %v1149
        %v1189 = vmul.f32 %v1092, %v1153
        %v1190 = vmul.f32 %v1093, %v1149
        %v1191 = vmul.f32 %v1094, %v1153
        %v1192 = vmul.f32 %v1095, %v1149
        %v1193 = vmul.f32 %v1096, %v1153
        %v1194 = vmul.f32 %v1097, %v1157
        %v1195 = vmul.f32 %v1098, %v1161
        %v1196 = vmul.f32 %v1099, %v1157
        %v1197 = vmul.f32 %v1100, %v1161
        %v1198 = vmul.f32 %v1101, %v1157
        %v1199 = vmul.f32 %v1102, %v1161
        %v1200 = vmul.f32 %v1103, %v1157
        %v1201 = vmul.f32 %v1104, %v1161
        %v1202 = vmul.f32 %v1105, %v1165
        %v1203 = vmul.f32 %v1106, %v1169
        %v1204 = vmul.f32 %v1107, %v1165
        %v1205 = vmul.f32 %v1108, %v1169
        %v1206 = vmul.f32 %v1109, %v1165
        %v1207 = vmul.f32 %v1110, %v1169
        %v1208 = vmul.f32 %v1111, %v1165
        %v1209 = vmul.f32 %v1112, %v1169
        %v1210 = vmul.f32 %v1113, %v1173
        %v1211 = vmul.f32 %v1114, %v1177
        %v1212 = vmul.f32 %v1115, %v1173
        %v1213 = vmul.f32 %v1116, %v1177
        %v1214 = vmul.f32 %v1117, %v1173
        %v1215 = vmul.f32 %v1118, %v1177
        %v1216 = vmul.f32 %v1119, %v1173
        %v1217 = vmul.f32 %v1120, %v1177
        %v1218 = vpack.c.bf16 %v1188, %v1186
        %v1219 = vpack.c.bf16 %v1189, %v1187
        %v1220 = vpack.c.bf16 %v1192, %v1190
        %v1221 = vpack.c.bf16 %v1193, %v1191
        %v1222 = vpack.c.bf16 %v1196, %v1194
        %v1223 = vpack.c.bf16 %v1197, %v1195
        %v1224 = vpack.c.bf16 %v1200, %v1198
        %v1225 = vpack.c.bf16 %v1201, %v1199
        %v1226 = vpack.c.bf16 %v1204, %v1202
        %v1227 = vpack.c.bf16 %v1205, %v1203
        %v1228 = vpack.c.bf16 %v1208, %v1206
        %v1229 = vpack.c.bf16 %v1209, %v1207
        %v1230 = vpack.c.bf16 %v1212, %v1210
        %v1231 = vpack.c.bf16 %v1213, %v1211
        %v1232 = vpack.c.bf16 %v1216, %v1214
        %v1233 = vpack.c.bf16 %v1217, %v1215
        %v1234 = vld [vmem:[#allocation3] sm:$0xff]
        %v1235 = vld [vmem:[#allocation3 + $0x8] sm:$0xff]
        %v1236 = vld [vmem:[#allocation2] sm:$0xff]
        %v1237 = vld [vmem:[#allocation2 + $0x8] sm:$0xff]
        %v1238 = vld [vmem:[#allocation2 + $0x10] sm:$0xff]
        %v1239 = vld [vmem:[#allocation2 + $0x18] sm:$0xff]
        %v1242 = vunpack.c.l.b16 %v1234
        %v1243 = vunpack.c.l.b16 %v1235
        %v1244 = vpack.c.b16 %v1243, %v1242
        %1246 = vmatprep.subr.bf16.mxu0 %v1009
        %1247 = vmatpush1.bf16.msra.mxu0 %v1008
        %1248 = vmatprep.subr.bf16.mxu0 %v1011
        %1249 = vmatpush1.bf16.msra.mxu0 %v1010
        %1250 = vmatprep.subr.bf16.mxu0 %v1013
        %1251 = vmatpush1.bf16.msra.mxu0 %v1012
        %1252 = vmatprep.subr.bf16.mxu0 %v1015
        %1253 = vmatpush1.bf16.msra.mxu0 %v1014
        %1254 = vmatprep.subr.bf16.mxu0 %v1017
        %1255 = vmatpush1.bf16.msra.mxu0 %v1016
        %1256 = vmatprep.subr.bf16.mxu0 %v1019
        %1257 = vmatpush1.bf16.msra.mxu0 %v1018
        %1258 = vmatprep.subr.bf16.mxu0 %v1021
        %1259 = vmatpush1.bf16.msra.mxu0 %v1020
        %1260 = vmatprep.subr.bf16.mxu0 %v1023
        %1261 = vmatpush1.bf16.msra.mxu0 %v1022
        %1262 = vmatprep.subr.bf16.mxu0 0
        %1263 = vmatpush1.bf16.msra.mxu0 0
        %1264 = vmatprep.subr.bf16.mxu0 0
        %1265 = vmatpush1.bf16.msra.mxu0 0
        %1266 = vmatprep.subr.bf16.mxu0 0
        %1267 = vmatpush1.bf16.msra.mxu0 0
        %1268 = vmatprep.subr.bf16.mxu0 0
        %1269 = vmatpush1.bf16.msra.mxu0 0
        %1270 = vmatprep.subr.bf16.mxu0 0
        %1271 = vmatpush1.bf16.msra.mxu0 0
        %1272 = vmatprep.subr.bf16.mxu0 0
        %1273 = vmatpush1.bf16.msra.mxu0 0
        %1274 = vmatprep.subr.bf16.mxu0 0
        %1275 = vmatpush1.bf16.msra.mxu0 0
        %1276 = vmatprep.subr.bf16.mxu0 0
        %1277 = vmatpush1.bf16.msra.mxu0 0
        %1278 = vmatprep.mubr.bf16.mxu0 0
        %1279 = vmatmul.mubr.bf16.gmra.mrb[0].mxu0 %v1244
        %v1280 = vpop.f32.mrb[0].mxu0
        %v1281 = vadd.f32 0.0, %v1280
        %v1282 = vpop.f32.mrb[0].mxu0
        %v1283 = vadd.f32 0.0, %v1282
        %v1284 = vpop.f32.mrb[0].mxu0
        %v1285 = vadd.f32 0.0, %v1284
        %v1286 = vpop.f32.mrb[0].mxu0
        %v1287 = vadd.f32 0.0, %v1286
        %1288 = vdwg.mxu0
        %v1289 = vadd.f32 %v1236, %v1281
        %v1290 = vadd.f32 %v1237, %v1283
        %v1291 = vadd.f32 %v1238, %v1285
        %v1292 = vadd.f32 %v1239, %v1287
        %1293 = vst [vmem:[#allocation2] sm:$0xff] %v1289
        %1294 = vst [vmem:[#allocation2 + $0x8] sm:$0xff] %v1290
        %1295 = vst [vmem:[#allocation2 + $0x10] sm:$0xff] %v1291
        %1296 = vst [vmem:[#allocation2 + $0x18] sm:$0xff] %v1292
        %v1297 = vld [vmem:[#allocation2] sm:$0xff]
        %v1298 = vld [vmem:[#allocation2 + $0x8] sm:$0xff]
        %v1299 = vld [vmem:[#allocation2 + $0x10] sm:$0xff]
        %v1300 = vld [vmem:[#allocation2 + $0x18] sm:$0xff]
        %v1301 = vunpack.c.h.b16 %v1234
        %v1302 = vunpack.c.h.b16 %v1235
        %v1303 = vpack.c.b16 %v1302, %v1301
        %1305 = vmatprep.subr.bf16.mxu0 %v1219
        %1306 = vmatpush1.bf16.msra.mxu0 %v1218
        %1307 = vmatprep.subr.bf16.mxu0 %v1221
        %1308 = vmatpush1.bf16.msra.mxu0 %v1220
        %1309 = vmatprep.subr.bf16.mxu0 %v1223
        %1310 = vmatpush1.bf16.msra.mxu0 %v1222
        %1311 = vmatprep.subr.bf16.mxu0 %v1225
        %1312 = vmatpush1.bf16.msra.mxu0 %v1224
        %1313 = vmatprep.subr.bf16.mxu0 %v1227
        %1314 = vmatpush1.bf16.msra.mxu0 %v1226
        %1315 = vmatprep.subr.bf16.mxu0 %v1229
        %1316 = vmatpush1.bf16.msra.mxu0 %v1228
        %1317 = vmatprep.subr.bf16.mxu0 %v1231
        %1318 = vmatpush1.bf16.msra.mxu0 %v1230
        %1319 = vmatprep.subr.bf16.mxu0 %v1233
        %1320 = vmatpush1.bf16.msra.mxu0 %v1232
        %1321 = vmatprep.subr.bf16.mxu0 0
        %1322 = vmatpush1.bf16.msra.mxu0 0
        %1323 = vmatprep.subr.bf16.mxu0 0
        %1324 = vmatpush1.bf16.msra.mxu0 0
        %1325 = vmatprep.subr.bf16.mxu0 0
        %1326 = vmatpush1.bf16.msra.mxu0 0
        %1327 = vmatprep.subr.bf16.mxu0 0
        %1328 = vmatpush1.bf16.msra.mxu0 0
        %1329 = vmatprep.subr.bf16.mxu0 0
        %1330 = vmatpush1.bf16.msra.mxu0 0
        %1331 = vmatprep.subr.bf16.mxu0 0
        %1332 = vmatpush1.bf16.msra.mxu0 0
        %1333 = vmatprep.subr.bf16.mxu0 0
        %1334 = vmatpush1.bf16.msra.mxu0 0
        %1335 = vmatprep.subr.bf16.mxu0 0
        %1336 = vmatpush1.bf16.msra.mxu0 0
        %1337 = vmatprep.mubr.bf16.mxu0 0
        %1338 = vmatmul.mubr.bf16.gmra.mrb[0].mxu0 %v1303
        %v1339 = vpop.f32.mrb[0].mxu0
        %v1340 = vadd.f32 0.0, %v1339
        %v1341 = vpop.f32.mrb[0].mxu0
        %v1342 = vadd.f32 0.0, %v1341
        %v1343 = vpop.f32.mrb[0].mxu0
        %v1344 = vadd.f32 0.0, %v1343
        %v1345 = vpop.f32.mrb[0].mxu0
        %v1346 = vadd.f32 0.0, %v1345
        %1347 = vdwg.mxu0
        %v1348 = vadd.f32 %v1297, %v1340
        %v1349 = vadd.f32 %v1298, %v1342
        %v1350 = vadd.f32 %v1299, %v1344
        %v1351 = vadd.f32 %v1300, %v1346
        %1352 = vst [vmem:[#allocation2] sm:$0xff] %v1348
        %1353 = vst [vmem:[#allocation2 + $0x8] sm:$0xff] %v1349
        %1354 = vst [vmem:[#allocation2 + $0x10] sm:$0xff] %v1350
        %1355 = vst [vmem:[#allocation2 + $0x18] sm:$0xff] %v1351
        // Predicated region
        $region73: #{tpu_custom_call.1} parent=47 // pred_check
          %p1356 = pneg %p520
        $region74: #{tpu_custom_call.1} parent=47 // pred_check_branch
          %1358 = sbr.rel (%p1356) target = $region76
        $region75: #{tpu_custom_call.1} parent=47 // pred_region
          %v1359 = vld [vmem:[#allocation2] sm:$0xff]
          %v1360 = vld [vmem:[#allocation2 + $0x8] sm:$0xff]
          %v1361 = vld [vmem:[#allocation2 + $0x10] sm:$0xff]
          %v1362 = vld [vmem:[#allocation2 + $0x18] sm:$0xff]
          %1363 = vst [vmem:[%s498] sm:$0xff] %v1359
          %1364 = vst [vmem:[%s498 + $0x8] sm:$0xff] %v1360
          %1365 = vst [vmem:[%s498 + $0x10] sm:$0xff] %v1361
          %1366 = vst [vmem:[%s498 + $0x18] sm:$0xff] %v1362
        $region76: #{tpu_custom_call.1} parent=47 // pred_fallthru
          _
        %s1367 = sand.u32 %s247, 1
        %s1368 = scalar_lea.sflag [#allocation5], %s1367
        %s1369 = sand.u32 %s247, 1
        %s1370 = smul.addr %s1369, 32
        %s1371 = scalar_lea.vmem [#allocation12], %s1370
        // Predicated region
        $region77: #{tpu_custom_call.1} parent=47 // pred_check
          %p1372 = pneg %p257
        $region78: #{tpu_custom_call.1} parent=47 // pred_check_branch
          %1374 = sbr.rel (%p1372) target = $region80
        $region79: #{tpu_custom_call.1} parent=47 // pred_region
          %s1375 = smul.u32 2, %s33
          %s1376 = smul.u32 2, %s34
          %s1378 = ssub.s32 512, 512
          %1379 = vsyncadd %s1368, %s1378
          %s1380 = smul.addr %s1375, 4
          %s1381 = sadd.s32 %s1376, %s1380
          %s1382 = smul.addr %s1381, 128
          %s1383 = scalar_lea.hbm %s7, %s1382
          %s1384 = sshll.u32 %s1371, 4
          %s1385 = int_to_ptr.vmem [resolvable:$true] %s1384
          %1390 = dma.vmem_to_hbm [thread:$0]  %s1385, 512, %s1383, %s1368, 256, 512, 16
        $region80: #{tpu_custom_call.1} parent=47 // pred_fallthru
          _
      $region48: #{tpu_custom_call.1} parent=5 // pred_fallthru
        _
      %p1391 = scmp.le.s32.totalorder 2, %s23
      // Predicated region
      $region81: #{tpu_custom_call.1} parent=5 // pred_check
        %p1392 = pneg %p1391
      $region82: #{tpu_custom_call.1} parent=5 // pred_check_branch
        %1394 = sbr.rel (%p1392) target = $region84
      $region83: #{tpu_custom_call.1} parent=5 // pred_region
        %s1395 = ssub.s32 %s23, 2
        // Predicated region
        $region85: #{tpu_custom_call.1} parent=83 // pred_check
          %p1396 = pneg %p263
        $region86: #{tpu_custom_call.1} parent=83 // pred_check_branch
          %1398 = sbr.rel (%p1396) target = $region88
        $region87: #{tpu_custom_call.1} parent=83 // pred_region
          %s1399 = sand.u32 %s248, 1
          %s1400 = scalar_lea.sflag [#allocation5], %s1399
          %s1401 = sand.u32 %s248, 1
          %s1402 = smul.addr %s1401, 32
          %s1403 = scalar_lea.vmem [#allocation12], %s1402
          %1404 = dma.done %s1400, 512
        $region88: #{tpu_custom_call.1} parent=83 // pred_fallthru
          _
      $region84: #{tpu_custom_call.1} parent=5 // pred_fallthru
        _
    $region6: #{tpu_custom_call.1} parent=1 // loop_footer
      %s27 = sadd.s32 1, %s23
    $region7: #{tpu_custom_call.1} parent=1 // loop_footer_branch
      %22 = sbr.rel target = $region3
    $region8: #{tpu_custom_call.1} parent=1 // loop_exit
      _
    %1405 = vsyncpa [#allocation4], 1
    %s1406 = scalar_lea.sflag [#allocation4], 1
    %1407 = vsyncpa %s1406, 1
    %1408 = vsyncpa [#allocation7], 1
    %s1409 = scalar_lea.sflag [#allocation7], 1
    %1410 = vsyncpa %s1409, 1
    %1411 = vsyncpa [#allocation10], 1
    %s1412 = scalar_lea.sflag [#allocation10], 1
    %1413 = vsyncpa %s1412, 1
    %1414 = vsyncpa [#allocation5], 1
    %s1415 = scalar_lea.sflag [#allocation5], 1
    %1416 = vsyncpa %s1415, 1

</llo_original>
